<compile_context>
chip_gen: v7x
topology: tpu7x:2x2x1
jax: 0.10.0
libtpu: 0.0.40
codegen_flags: <defaults>
</compile_context>

<pallas_src>
import functools

import jax
import jax.numpy as jnp
import numpy as np
from jax.experimental import pallas as pl
from jax.experimental.pallas import tpu as pltpu

# ---------------------------------------------------------------------------
# Small, module-consistent shapes
# ---------------------------------------------------------------------------
B, L, SIZE = 2, 16, 32          # batch, max_len, self.size
N_LABELS = 8                    # n_labels[0] (single level, n_level = 1)
D_A = 16                        # args.d_a
FEAT_DIM = 24                   # stand-in for the 300-d label word embeddings
GCN_INNER = 32                  # stand-in for inner_dims=1024

LANE = 128


def _round_up(v, m):
    return ((v + m - 1) // m) * m


# ---------------------------------------------------------------------------
# Pallas kernel: the whole batch (or a batch chunk) per grid step.
# ---------------------------------------------------------------------------
def attention_kernel(x_ref, m1_ref, m2t_ref, m3_ref, c3_ref,
                     out_ref, att_ref, *, seq_len):
    # x_ref   : (Bc, L_PAD, SIZE)  zero-padded along max_len
    # m1_ref  : (SIZE, N)   = first_linears.weight.T @ gcn_1_emb.T
    # m2t_ref : (N, N)      = gcn_2_emb @ second_linears.weight  (== M2.T)
    # m3_ref  : (SIZE, N)   = third_linears.weight.T @ gcn_3_emb.T
    # c3_ref  : (1, N)      = third_linears.bias @ gcn_3_emb.T
    # out_ref : (Bc, N)
    # att_ref : (Bc, N, L_PAD)   lane-dense attention weights
    x = x_ref[...]
    M1 = m1_ref[...]
    M2T = m2t_ref[...]
    M3 = m3_ref[...]
    c3 = c3_ref[...]

    bc, l_pad, size = x.shape
    n = M1.shape[-1]
    f32 = jnp.float32
    ee = functools.partial(jnp.einsum, preferred_element_type=f32)

    # ---- First attention layer: weights = tanh(x @ (x^T x) @ M1) = tanh((x x^T)(x M1))
    xm = (x.reshape(bc * l_pad, size) @ M1).reshape(bc, l_pad, n)      # (Bc,Lp,N)
    xx = ee('bls,bks->blk', x, x)                                      # (Bc,Lp,Lp)
    weights = jnp.tanh(ee('blk,bkn->bln', xx, xm))                     # (Bc,Lp,N)

    # ---- Second attention layer, produced directly in (N, L) layout:
    #   att^T = (M2^T @ weights^T) @ (weights weights^T)
    m2t_b = jnp.broadcast_to(M2T, (bc,) + M2T.shape)                   # (Bc,N,N)
    wm_t = ee('bnp,blp->bnl', m2t_b, weights)                          # (Bc,N,Lp)
    ww = ee('blm,bkm->blk', weights, weights)                          # (Bc,Lp,Lp) symmetric
    z = ee('bnq,bql->bnl', wm_t, ww)                                   # (Bc,N,Lp)

    # softmax over max_len (== F.softmax(att_weights, 1) then transpose(1,2));
    # padded positions masked so they contribute exactly 0.
    lane = jax.lax.broadcasted_iota(jnp.int32, z.shape, dimension=2)
    z = jnp.where(lane < seq_len, z, -1e30)
    z = z - jnp.max(z, axis=-1, keepdims=True)
    e = jnp.exp(z)
    att_t = e * pl.reciprocal(jnp.sum(e, axis=-1, keepdims=True), approx=True)

    # weighted_output = att_weights @ x
    wo = ee('bnl,bls->bns', att_t, x)                                  # (Bc,N,SIZE)

    # ---- Third layer reduced to its diagonal form:
    #   out[n] = sum_s gcn_weighted_output[n,s] * wo[n,s]
    #          = sum_m (wo wo^T)[m,n] * (wo @ M3 + c3)[m,n]
    p = ee('bns,bms->bnm', wo, wo)                                     # (Bc,N,N) symmetric
    q = (wo.reshape(bc * n, size) @ M3).reshape(bc, n, n) + c3         # (Bc,N,N)

    out_ref[...] = jnp.sum(p * q, axis=1)                              # (Bc,N)
    att_ref[...] = att_t                                               # full, unmasked store


def attention_forward(x, params, *, num_batch_chunks=1):
    """Pallas forward.

    num_batch_chunks=1 (single grid step) is optimal on v5e/v6e (one TensorCore);
    on v7x pass num_batch_chunks=2 so the "parallel" grid axis shards the batch
    across the two TensorCores.
    """
    W1, E1, W2, E2, W3, b3, E3 = params
    bx, lx, dx = x.shape
    nlab = W3.shape[0]
    assert bx % num_batch_chunks == 0
    chunk = bx // num_batch_chunks

    # Hoisted, input-independent weight products (done once, outside the kernel).
    M1 = W1.T @ E1.T                       # (SIZE, N)
    M2T = E2 @ W2                          # (N, N)  == (W2.T @ E2.T).T
    M3 = W3.T @ E3.T                       # (SIZE, N)
    c3 = b3 @ E3.T                         # (1, N)

    # Zero-pad max_len to a lane multiple so the attention store is lane-dense.
    l_pad = max(LANE, _round_up(lx, LANE))
    if l_pad != lx:
        x = jnp.pad(x, ((0, 0), (0, l_pad - lx), (0, 0)))

    def full_spec(arr):
        nd = arr.ndim
        return pl.BlockSpec(arr.shape, lambda b, _nd=nd: (0,) * _nd)

    out_shapes = (
        jax.ShapeDtypeStruct((bx, nlab), jnp.float32),        # weighted_output
        jax.ShapeDtypeStruct((bx, nlab, l_pad), jnp.float32),  # att_weights (padded)
    )
    kernel = functools.partial(attention_kernel, seq_len=lx)

    out, att_pad = pl.pallas_call(
        kernel,
        out_shape=out_shapes,
        grid_spec=pltpu.PrefetchScalarGridSpec(
            num_scalar_prefetch=0,
            grid=(num_batch_chunks,),
            in_specs=[
                pl.BlockSpec((chunk, l_pad, dx), lambda b: (b, 0, 0)),
                full_spec(M1), full_spec(M2T), full_spec(M3), full_spec(c3),
            ],
            out_specs=[
                pl.BlockSpec((chunk, nlab), lambda b: (b, 0)),
                pl.BlockSpec((chunk, nlab, l_pad), lambda b: (b, 0, 0)),
            ],
        ),
        compiler_params=pltpu.CompilerParams(
            dimension_semantics=("parallel",)),
    )(x, M1, M2T, M3, c3)

    return out, att_pad[:, :, :lx]


# ---------------------------------------------------------------------------
# Parameter setup (plain-JAX glue): synthetic GCN label embeddings + linears
# ---------------------------------------------------------------------------
def gcn_label_embeddings(key, n_labels, feat_dim, inner, out_dim):
    """2-layer GCN over a synthetic label graph: adj_n @ relu(adj_n @ X @ Wg1) @ Wg2."""
    k1, k2, k3, k4 = jax.random.split(key, 4)
    feats = jax.random.normal(k1, (n_labels, feat_dim), jnp.float32) * 0.1
    adj = jax.random.uniform(k2, (n_labels, n_labels), jnp.float32)
    adj = 0.5 * (adj + adj.T) + jnp.eye(n_labels, dtype=jnp.float32)
    adj_n = adj / jnp.sum(adj, axis=1, keepdims=True)
    Wg1 = jax.random.normal(k3, (feat_dim, inner), jnp.float32) * 0.03
    Wg2 = jax.random.normal(k4, (inner, out_dim), jnp.float32) * 0.03
    h = jax.nn.relu(adj_n @ feats @ Wg1)
    return adj_n @ h @ Wg2                        # (n_labels, out_dim)


def init_params(key):
    ks = jax.random.split(key, 8)
    W1 = jax.random.normal(ks[0], (D_A, SIZE), jnp.float32) * 0.03           # first_linears
    W2 = jax.random.normal(ks[1], (N_LABELS, N_LABELS), jnp.float32) * 0.03  # second_linears
    W3 = jax.random.normal(ks[2], (N_LABELS, SIZE), jnp.float32) * 0.03      # third_linears
    b3 = jax.random.normal(ks[3], (1, N_LABELS), jnp.float32) * 0.03         # third_linears bias
    E1 = gcn_label_embeddings(ks[4], N_LABELS, FEAT_DIM, GCN_INNER, D_A)
    E2 = gcn_label_embeddings(ks[5], N_LABELS, FEAT_DIM, GCN_INNER, N_LABELS)
    E3 = gcn_label_embeddings(ks[6], N_LABELS, FEAT_DIM, GCN_INNER, N_LABELS)
    return (W1, E1, W2, E2, W3, b3, E3)


# ---------------------------------------------------------------------------
# Pure-JAX reference (mirrors the PyTorch forward under the same assumptions)
# ---------------------------------------------------------------------------
def reference_forward(x, params):
    W1, E1, W2, E2, W3, b3, E3 = params

    def layer_ops_matmul(inp, W, E, b=None):
        h = inp @ W.T
        if b is not None:
            h = h + b
        return jnp.swapaxes(inp, -1, -2) @ h @ E.T

    weights = jnp.tanh(x @ layer_ops_matmul(x, W1, E1))
    att = weights @ layer_ops_matmul(weights, W2, E2)
    att = jax.nn.softmax(att, axis=1)
    att = jnp.swapaxes(att, 1, 2)
    wo = att @ x
    gwo = jnp.swapaxes(layer_ops_matmul(wo, W3, E3, b3), 1, 2)
    out = jnp.sum(gwo * wo, axis=2)
    return out, att


# ---------------------------------------------------------------------------
if __name__ == "__main__":
    key = jax.random.PRNGKey(0)
    kx, kp = jax.random.split(key)
    x = jax.random.normal(kx, (B, L, SIZE), jnp.float32)
    params = init_params(kp)

    # Single grid step (whole batch batched in-kernel); use num_batch_chunks=2 on v7x.
    out, att = attention_forward(x, params, num_batch_chunks=1)
    out, att = jax.block_until_ready((out, att))

    ref_out, ref_att = reference_forward(x, params)
    np.testing.assert_allclose(np.asarray(out), np.asarray(ref_out), rtol=2e-2, atol=2e-2)
    np.testing.assert_allclose(np.asarray(att), np.asarray(ref_att), rtol=2e-2, atol=2e-2)

    assert out.shape == (B, N_LABELS)
    assert att.shape == (B, N_LABELS, L)
    print("KERNEL_OK")
</pallas_src>

<mosaic_0001>
module attributes {stable_mosaic.version = 11 : i64} {
  func.func @attention_kernel(%arg0: i32, %arg1: memref<2x128x32xf32, #tpu.memory_space<vmem>>, %arg2: memref<32x8xf32, #tpu.memory_space<vmem>>, %arg3: memref<8x8xf32, #tpu.memory_space<vmem>>, %arg4: memref<32x8xf32, #tpu.memory_space<vmem>>, %arg5: memref<1x8xf32, #tpu.memory_space<vmem>>, %arg6: memref<2x8xf32, #tpu.memory_space<vmem>>, %arg7: memref<2x8x128xf32, #tpu.memory_space<vmem>>) attributes {dimension_semantics = [#tpu.dimension_semantics<parallel>], iteration_bounds = array<i64: 1>, scalar_prefetch = 0 : i64, scratch_operands = 0 : i64, tpu.core_type = #tpu.core_type<tc>, window_params = [{transform_indices = @transform_0, window_bounds = array<i64: 2, 128, 32>}, {pipeline_mode = #tpu.pipeline_mode<synchronous>, transform_indices = @transform_1, window_bounds = array<i64: 32, 8>}, {pipeline_mode = #tpu.pipeline_mode<synchronous>, transform_indices = @transform_2, window_bounds = array<i64: 8, 8>}, {pipeline_mode = #tpu.pipeline_mode<synchronous>, transform_indices = @transform_3, window_bounds = array<i64: 32, 8>}, {pipeline_mode = #tpu.pipeline_mode<synchronous>, transform_indices = @transform_4, window_bounds = array<i64: 1, 8>}, {transform_indices = @transform_5, window_bounds = array<i64: 2, 8>}, {transform_indices = @transform_6, window_bounds = array<i64: 2, 8, 128>}]} {
    %c0 = arith.constant 0 : index
    %c0_0 = arith.constant 0 : index
    %c0_1 = arith.constant 0 : index
    %0 = vector.load %arg1[%c0, %c0_0, %c0_1] : memref<2x128x32xf32, #tpu.memory_space<vmem>>, vector<2x128x32xf32>
    %c0_2 = arith.constant 0 : index
    %c0_3 = arith.constant 0 : index
    %1 = vector.load %arg2[%c0_2, %c0_3] : memref<32x8xf32, #tpu.memory_space<vmem>>, vector<32x8xf32>
    %c0_4 = arith.constant 0 : index
    %c0_5 = arith.constant 0 : index
    %2 = vector.load %arg3[%c0_4, %c0_5] : memref<8x8xf32, #tpu.memory_space<vmem>>, vector<8x8xf32>
    %c0_6 = arith.constant 0 : index
    %c0_7 = arith.constant 0 : index
    %3 = vector.load %arg4[%c0_6, %c0_7] : memref<32x8xf32, #tpu.memory_space<vmem>>, vector<32x8xf32>
    %c0_8 = arith.constant 0 : index
    %c0_9 = arith.constant 0 : index
    %4 = vector.load %arg5[%c0_8, %c0_9] : memref<1x8xf32, #tpu.memory_space<vmem>>, vector<1x8xf32>
    %5 = vector.shape_cast %0 : vector<2x128x32xf32> to vector<256x32xf32>
    %cst = arith.constant dense<0.000000e+00> : vector<256x8xf32>
    %6 = tpu.matmul %5, %1, %cst {dimension_numbers = #tpu.dot_dimension_numbers<[1], [0], [0], [1], [0, 0, 1, 1], [], []>} : vector<256x32xf32>, vector<32x8xf32>, vector<256x8xf32> -> vector<256x8xf32>
    %7 = vector.shape_cast %6 : vector<256x8xf32> to vector<2x128x8xf32>
    "tpu.trace_start"() <{level = 10 : i32, message = "bls,bks->blk"}> : () -> ()
    %cst_10 = arith.constant dense<0.000000e+00> : vector<2x128x128xf32>
    %8 = tpu.matmul %0, %0, %cst_10 {dimension_numbers = #tpu.dot_dimension_numbers<[2], [2], [1], [1], [0, 0, 0, 1, 1, 1], [0], [0]>} : vector<2x128x32xf32>, vector<2x128x32xf32>, vector<2x128x128xf32> -> vector<2x128x128xf32>
    "tpu.trace_stop"() : () -> ()
    "tpu.trace_start"() <{level = 10 : i32, message = "blk,bkn->bln"}> : () -> ()
    %cst_11 = arith.constant dense<0.000000e+00> : vector<2x128x8xf32>
    %9 = tpu.matmul %8, %7, %cst_11 {dimension_numbers = #tpu.dot_dimension_numbers<[2], [1], [1], [2], [0, 0, 0, 1, 1, 2], [0], [0]>} : vector<2x128x128xf32>, vector<2x128x8xf32>, vector<2x128x8xf32> -> vector<2x128x8xf32>
    "tpu.trace_stop"() : () -> ()
    %10 = math.tanh %9 : vector<2x128x8xf32>
    %11 = vector.shape_cast %2 : vector<8x8xf32> to vector<1x8x8xf32>
    %12 = vector.broadcast %11 : vector<1x8x8xf32> to vector<2x8x8xf32>
    "tpu.trace_start"() <{level = 10 : i32, message = "bnp,blp->bnl"}> : () -> ()
    %cst_12 = arith.constant dense<0.000000e+00> : vector<2x8x128xf32>
    %13 = tpu.matmul %12, %10, %cst_12 {dimension_numbers = #tpu.dot_dimension_numbers<[2], [2], [1], [1], [0, 0, 0, 1, 1, 1], [0], [0]>} : vector<2x8x8xf32>, vector<2x128x8xf32>, vector<2x8x128xf32> -> vector<2x8x128xf32>
    "tpu.trace_stop"() : () -> ()
    "tpu.trace_start"() <{level = 10 : i32, message = "blm,bkm->blk"}> : () -> ()
    %cst_13 = arith.constant dense<0.000000e+00> : vector<2x128x128xf32>
    %14 = tpu.matmul %10, %10, %cst_13 {dimension_numbers = #tpu.dot_dimension_numbers<[2], [2], [1], [1], [0, 0, 0, 1, 1, 1], [0], [0]>} : vector<2x128x8xf32>, vector<2x128x8xf32>, vector<2x128x128xf32> -> vector<2x128x128xf32>
    "tpu.trace_stop"() : () -> ()
    "tpu.trace_start"() <{level = 10 : i32, message = "bnq,bql->bnl"}> : () -> ()
    %cst_14 = arith.constant dense<0.000000e+00> : vector<2x8x128xf32>
    %15 = tpu.matmul %13, %14, %cst_14 {dimension_numbers = #tpu.dot_dimension_numbers<[2], [1], [1], [2], [0, 0, 0, 1, 1, 2], [0], [0]>} : vector<2x8x128xf32>, vector<2x128x128xf32>, vector<2x8x128xf32> -> vector<2x8x128xf32>
    "tpu.trace_stop"() : () -> ()
    %16 = tpu.iota {dimensions = array<i32: 2>} : vector<2x8x128xi32>
    %c16_i32 = arith.constant 16 : i32
    %17 = vector.broadcast %c16_i32 : i32 to vector<2x8x128xi32>
    %18 = arith.cmpi slt, %16, %17 : vector<2x8x128xi32>
    %cst_15 = arith.constant -1.000000e+30 : f32
    %19 = vector.broadcast %cst_15 : f32 to vector<2x8x128xf32>
    %20 = arith.select %18, %15, %19 : vector<2x8x128xi1>, vector<2x8x128xf32>
    %cst_16 = arith.constant dense<0xFF800000> : vector<2x8xf32>
    %21 = vector.multi_reduction <maximumf>, %20, %cst_16 [2] : vector<2x8x128xf32> to vector<2x8xf32>
    %22 = vector.shape_cast %21 : vector<2x8xf32> to vector<2x8x1xf32>
    %23 = vector.broadcast %22 : vector<2x8x1xf32> to vector<2x8x128xf32>
    %24 = arith.subf %20, %23 : vector<2x8x128xf32>
    %25 = math.exp %24 : vector<2x8x128xf32>
    %cst_17 = arith.constant dense<0.000000e+00> : vector<2x8xf32>
    %26 = vector.multi_reduction <add>, %25, %cst_17 [2] : vector<2x8x128xf32> to vector<2x8xf32>
    %27 = vector.shape_cast %26 : vector<2x8xf32> to vector<2x8x1xf32>
    %28 = tpu.reciprocal %27 {approx = true} : vector<2x8x1xf32> -> vector<2x8x1xf32>
    %29 = vector.broadcast %28 : vector<2x8x1xf32> to vector<2x8x128xf32>
    %30 = arith.mulf %25, %29 : vector<2x8x128xf32>
    "tpu.trace_start"() <{level = 10 : i32, message = "bnl,bls->bns"}> : () -> ()
    %cst_18 = arith.constant dense<0.000000e+00> : vector<2x8x32xf32>
    %31 = tpu.matmul %30, %0, %cst_18 {dimension_numbers = #tpu.dot_dimension_numbers<[2], [1], [1], [2], [0, 0, 0, 1, 1, 2], [0], [0]>} : vector<2x8x128xf32>, vector<2x128x32xf32>, vector<2x8x32xf32> -> vector<2x8x32xf32>
    "tpu.trace_stop"() : () -> ()
    "tpu.trace_start"() <{level = 10 : i32, message = "bns,bms->bnm"}> : () -> ()
    %cst_19 = arith.constant dense<0.000000e+00> : vector<2x8x8xf32>
    %32 = tpu.matmul %31, %31, %cst_19 {dimension_numbers = #tpu.dot_dimension_numbers<[2], [2], [1], [1], [0, 0, 0, 1, 1, 1], [0], [0]>} : vector<2x8x32xf32>, vector<2x8x32xf32>, vector<2x8x8xf32> -> vector<2x8x8xf32>
    "tpu.trace_stop"() : () -> ()
    %33 = vector.shape_cast %31 : vector<2x8x32xf32> to vector<16x32xf32>
    %cst_20 = arith.constant dense<0.000000e+00> : vector<16x8xf32>
    %34 = tpu.matmul %33, %3, %cst_20 {dimension_numbers = #tpu.dot_dimension_numbers<[1], [0], [0], [1], [0, 0, 1, 1], [], []>} : vector<16x32xf32>, vector<32x8xf32>, vector<16x8xf32> -> vector<16x8xf32>
    %35 = vector.shape_cast %34 : vector<16x8xf32> to vector<2x8x8xf32>
    %36 = vector.shape_cast %4 : vector<1x8xf32> to vector<1x1x8xf32>
    %37 = vector.broadcast %36 : vector<1x1x8xf32> to vector<2x8x8xf32>
    %38 = arith.addf %35, %37 : vector<2x8x8xf32>
    %39 = arith.mulf %32, %38 : vector<2x8x8xf32>
    %cst_21 = arith.constant dense<0.000000e+00> : vector<2x8xf32>
    %40 = vector.multi_reduction <add>, %39, %cst_21 [1] : vector<2x8x8xf32> to vector<2x8xf32>
    %c0_22 = arith.constant 0 : index
    %c0_23 = arith.constant 0 : index
    %41 = vector.load %arg6[%c0_22, %c0_23] : memref<2x8xf32, #tpu.memory_space<vmem>>, vector<2x8xf32>
    tpu.vector_store %arg6[%c0_22, %c0_23], %40 {strides = array<i32>} : memref<2x8xf32, #tpu.memory_space<vmem>>, vector<2x8xf32>,
    %c0_24 = arith.constant 0 : index
    %c0_25 = arith.constant 0 : index
    %c0_26 = arith.constant 0 : index
    %42 = vector.load %arg7[%c0_24, %c0_25, %c0_26] : memref<2x8x128xf32, #tpu.memory_space<vmem>>, vector<2x8x128xf32>
    tpu.vector_store %arg7[%c0_24, %c0_25, %c0_26], %30 {strides = array<i32>} : memref<2x8x128xf32, #tpu.memory_space<vmem>>, vector<2x8x128xf32>,
    return
  }
  func.func @transform_0(%arg0: i32) -> (i32, i32, i32) {
    %c0_i32 = arith.constant 0 : i32
    %c0_i32_0 = arith.constant 0 : i32
    %c0_i32_1 = arith.constant 0 : i32
    return %arg0, %c0_i32, %c0_i32_0 : i32, i32, i32
  }
  func.func @transform_1(%arg0: i32) -> (i32, i32) {
    %c0_i32 = arith.constant 0 : i32
    %c0_i32_0 = arith.constant 0 : i32
    %c0_i32_1 = arith.constant 0 : i32
    return %c0_i32, %c0_i32_0 : i32, i32
  }
  func.func @transform_2(%arg0: i32) -> (i32, i32) {
    %c0_i32 = arith.constant 0 : i32
    %c0_i32_0 = arith.constant 0 : i32
    %c0_i32_1 = arith.constant 0 : i32
    return %c0_i32, %c0_i32_0 : i32, i32
  }
  func.func @transform_3(%arg0: i32) -> (i32, i32) {
    %c0_i32 = arith.constant 0 : i32
    %c0_i32_0 = arith.constant 0 : i32
    %c0_i32_1 = arith.constant 0 : i32
    return %c0_i32, %c0_i32_0 : i32, i32
  }
  func.func @transform_4(%arg0: i32) -> (i32, i32) {
    %c0_i32 = arith.constant 0 : i32
    %c0_i32_0 = arith.constant 0 : i32
    %c0_i32_1 = arith.constant 0 : i32
    return %c0_i32, %c0_i32_0 : i32, i32
  }
  func.func @transform_5(%arg0: i32) -> (i32, i32) {
    %c0_i32 = arith.constant 0 : i32
    %c0_i32_0 = arith.constant 0 : i32
    return %arg0, %c0_i32 : i32, i32
  }
  func.func @transform_6(%arg0: i32) -> (i32, i32, i32) {
    %c0_i32 = arith.constant 0 : i32
    %c0_i32_0 = arith.constant 0 : i32
    %c0_i32_1 = arith.constant 0 : i32
    return %arg0, %c0_i32, %c0_i32_0 : i32, i32, i32
  }
}

</mosaic_0001>

<llo_original>
// kernel: tpu_custom_call.1
$region0: #{tpu_custom_call.1}
  #allocation0 [shape = 'u32[]', space=smem, size = 0x4, offset = 0x4, fixed_abs, tag = 'smem constant byte address 0x4 - core index']
  #allocation1 [shape = 'u32[144,128]{1,0:T(1,128)}', space=vmem, size = 0x12000, scoped, tag = 'internal scratch']
  %s0 = inlined_call_operand.vmem [shape: f32[2,128,32], index: 0, kind: input, shape index: {}]
  %s1 = inlined_call_operand.vmem [shape: f32[32,8], index: 1, kind: input, shape index: {}]
  %s2 = inlined_call_operand.vmem [shape: f32[8,8], index: 2, kind: input, shape index: {}]
  %s3 = inlined_call_operand.vmem [shape: f32[32,8], index: 3, kind: input, shape index: {}]
  %s4 = inlined_call_operand.vmem [shape: f32[1,8], index: 4, kind: input, shape index: {}]
  %s5 = inlined_call_operand.hbm [shape: f32[2,8], index: 5, kind: output, shape index: {0}]
  %s6 = inlined_call_operand.hbm [shape: f32[2,8,128], index: 6, kind: output, shape index: {1}]
  %7 = xla_tuple %s5, %s6
  %s8 = sld [smem:[#allocation0]]
  $region38: #{tpu_custom_call.1} parent=0
    _
  %s10 = ssub.s32 1, %s8
  %s11 = scalar_select 0, %s10, %s8
  $region1: #{tpu_custom_call.1} parent=0
    #allocation2 [shape = 'u8[1024]{0}', space=vmem, size = 0x400, scoped, tag = 'output window, operand 0, single buffered']
    #allocation3 [shape = 's32[1]{0}', space=sflag, size = 0x4, scoped, tag = 'scoped memory for tpu_custom_call.1']
    #allocation4 [shape = 'u8[8192]{0}', space=vmem, size = 0x2000, scoped, tag = 'output window, operand 1, single buffered']
    #allocation5 [shape = 's32[1]{0}', space=sflag, size = 0x4, scoped, tag = 'scoped memory for tpu_custom_call.1']
    %12 = vsyncpa [#allocation3], 0
    %13 = vsyncpa [#allocation5], 0
    // Predicated region
    $region2: #{tpu_custom_call.1} parent=1 // pred_check
      _
    $region3: #{tpu_custom_call.1} parent=1 // pred_check_branch
      %15 = sbr.rel (0) target = $region5
    $region4: #{tpu_custom_call.1} parent=1 // pred_region
      _
    $region5: #{tpu_custom_call.1} parent=1 // pred_fallthru
      _
    // Predicated region
    $region6: #{tpu_custom_call.1} parent=1 // pred_check
      _
    $region7: #{tpu_custom_call.1} parent=1 // pred_check_branch
      %17 = sbr.rel (0) target = $region9
    $region8: #{tpu_custom_call.1} parent=1 // pred_region
      _
    $region9: #{tpu_custom_call.1} parent=1 // pred_fallthru
      _
    // Predicated region
    $region10: #{tpu_custom_call.1} parent=1 // pred_check
      _
    $region11: #{tpu_custom_call.1} parent=1 // pred_check_branch
      %19 = sbr.rel (0) target = $region13
    $region12: #{tpu_custom_call.1} parent=1 // pred_region
      _
    $region13: #{tpu_custom_call.1} parent=1 // pred_fallthru
      _
    // Predicated region
    $region14: #{tpu_custom_call.1} parent=1 // pred_check
      _
    $region15: #{tpu_custom_call.1} parent=1 // pred_check_branch
      %21 = sbr.rel (0) target = $region17
    $region16: #{tpu_custom_call.1} parent=1 // pred_region
      _
    $region17: #{tpu_custom_call.1} parent=1 // pred_fallthru
      _
    // Predicated region
    $region18: #{tpu_custom_call.1} parent=1 // pred_check
      _
    $region19: #{tpu_custom_call.1} parent=1 // pred_check_branch
      %23 = sbr.rel (0) target = $region21
    $region20: #{tpu_custom_call.1} parent=1 // pred_region
      _
    $region21: #{tpu_custom_call.1} parent=1 // pred_fallthru
      _
    %v24 = vld [vmem:[%s0] sm:$0xff]
    %v25 = vld [vmem:[%s0 + $0x8] sm:$0xff]
    %v26 = vld [vmem:[%s0 + $0x10] sm:$0xff]
    %v27 = vld [vmem:[%s0 + $0x18] sm:$0xff]
    %v28 = vld [vmem:[%s0 + $0x20] sm:$0xff]
    %v29 = vld [vmem:[%s0 + $0x28] sm:$0xff]
    %v30 = vld [vmem:[%s0 + $0x30] sm:$0xff]
    %v31 = vld [vmem:[%s0 + $0x38] sm:$0xff]
    %v32 = vld [vmem:[%s0 + $0x40] sm:$0xff]
    %v33 = vld [vmem:[%s0 + $0x48] sm:$0xff]
    %v34 = vld [vmem:[%s0 + $0x50] sm:$0xff]
    %v35 = vld [vmem:[%s0 + $0x58] sm:$0xff]
    %v36 = vld [vmem:[%s0 + $0x60] sm:$0xff]
    %v37 = vld [vmem:[%s0 + $0x68] sm:$0xff]
    %v38 = vld [vmem:[%s0 + $0x70] sm:$0xff]
    %v39 = vld [vmem:[%s0 + $0x78] sm:$0xff]
    %v40 = vld [vmem:[%s0 + $0x80] sm:$0xff]
    %v41 = vld [vmem:[%s0 + $0x88] sm:$0xff]
    %v42 = vld [vmem:[%s0 + $0x90] sm:$0xff]
    %v43 = vld [vmem:[%s0 + $0x98] sm:$0xff]
    %v44 = vld [vmem:[%s0 + $0xa0] sm:$0xff]
    %v45 = vld [vmem:[%s0 + $0xa8] sm:$0xff]
    %v46 = vld [vmem:[%s0 + $0xb0] sm:$0xff]
    %v47 = vld [vmem:[%s0 + $0xb8] sm:$0xff]
    %v48 = vld [vmem:[%s0 + $0xc0] sm:$0xff]
    %v49 = vld [vmem:[%s0 + $0xc8] sm:$0xff]
    %v50 = vld [vmem:[%s0 + $0xd0] sm:$0xff]
    %v51 = vld [vmem:[%s0 + $0xd8] sm:$0xff]
    %v52 = vld [vmem:[%s0 + $0xe0] sm:$0xff]
    %v53 = vld [vmem:[%s0 + $0xe8] sm:$0xff]
    %v54 = vld [vmem:[%s0 + $0xf0] sm:$0xff]
    %v55 = vld [vmem:[%s0 + $0xf8] sm:$0xff]
    %v56 = vld [vmem:[%s1] sm:$0xff]
    %v57 = vld [vmem:[%s1 + $0x8] sm:$0xff]
    %v58 = vld [vmem:[%s1 + $0x10] sm:$0xff]
    %v59 = vld [vmem:[%s1 + $0x18] sm:$0xff]
    %v60 = vld [vmem:[%s2] sm:$0xff]
    %v61 = vld [vmem:[%s3] sm:$0xff]
    %v62 = vld [vmem:[%s3 + $0x8] sm:$0xff]
    %v63 = vld [vmem:[%s3 + $0x10] sm:$0xff]
    %v64 = vld [vmem:[%s3 + $0x18] sm:$0xff]
    %v65 = vld [vmem:[%s4] sm:$0x1]
    %vm66 = vcmask 261120
    %v68 = vsel %vm66, %v24, 0
    %v71 = vsel %vm66, %v25, 0
    %v74 = vsel %vm66, %v26, 0
    %v77 = vsel %vm66, %v27, 0
    %v80 = vsel %vm66, %v28, 0
    %v83 = vsel %vm66, %v29, 0
    %v86 = vsel %vm66, %v30, 0
    %v89 = vsel %vm66, %v31, 0
    %v92 = vsel %vm66, %v32, 0
    %v95 = vsel %vm66, %v33, 0
    %v98 = vsel %vm66, %v34, 0
    %v101 = vsel %vm66, %v35, 0
    %v104 = vsel %vm66, %v36, 0
    %v107 = vsel %vm66, %v37, 0
    %v110 = vsel %vm66, %v38, 0
    %v113 = vsel %vm66, %v39, 0
    %v116 = vsel %vm66, %v40, 0
    %v119 = vsel %vm66, %v41, 0
    %v122 = vsel %vm66, %v42, 0
    %v125 = vsel %vm66, %v43, 0
    %v128 = vsel %vm66, %v44, 0
    %v131 = vsel %vm66, %v45, 0
    %v134 = vsel %vm66, %v46, 0
    %v137 = vsel %vm66, %v47, 0
    %v140 = vsel %vm66, %v48, 0
    %v143 = vsel %vm66, %v49, 0
    %v146 = vsel %vm66, %v50, 0
    %v149 = vsel %vm66, %v51, 0
    %v152 = vsel %vm66, %v52, 0
    %v155 = vsel %vm66, %v53, 0
    %v158 = vsel %vm66, %v54, 0
    %v161 = vsel %vm66, %v55, 0
    %163 = vmatprep.subr.mxu0 0.0
    %164 = vmatpush1.msra.mxu0 %v56
    %165 = vmatprep.subr.mxu0 0.0
    %166 = vmatpush1.msra.mxu0 %v57
    %167 = vmatprep.subr.mxu0 0.0
    %168 = vmatpush1.msra.mxu0 %v58
    %169 = vmatprep.subr.mxu0 0.0
    %170 = vmatpush1.msra.mxu0 %v59
    %171 = vmatprep.subr.mxu0 0.0
    %172 = vmatpush1.msra.mxu0 0.0
    %173 = vmatprep.subr.mxu0 0.0
    %174 = vmatpush1.msra.mxu0 0.0
    %175 = vmatprep.subr.mxu0 0.0
    %176 = vmatpush1.msra.mxu0 0.0
    %177 = vmatprep.subr.mxu0 0.0
    %178 = vmatpush1.msra.mxu0 0.0
    %179 = vmatprep.subr.mxu0 0.0
    %180 = vmatpush1.msra.mxu0 0.0
    %181 = vmatprep.subr.mxu0 0.0
    %182 = vmatpush1.msra.mxu0 0.0
    %183 = vmatprep.subr.mxu0 0.0
    %184 = vmatpush1.msra.mxu0 0.0
    %185 = vmatprep.subr.mxu0 0.0
    %186 = vmatpush1.msra.mxu0 0.0
    %187 = vmatprep.subr.mxu0 0.0
    %188 = vmatpush1.msra.mxu0 0.0
    %189 = vmatprep.subr.mxu0 0.0
    %190 = vmatpush1.msra.mxu0 0.0
    %191 = vmatprep.subr.mxu0 0.0
    %192 = vmatpush1.msra.mxu0 0.0
    %193 = vmatprep.subr.mxu0 0.0
    %194 = vmatpush1.msra.mxu0 0.0
    %195 = vmatprep.subr.mxu0 0.0
    %196 = vmatpush1.msra.mxu0 0.0
    %197 = vmatprep.subr.mxu0 0.0
    %198 = vmatpush1.msra.mxu0 0.0
    %199 = vmatprep.subr.mxu0 0.0
    %200 = vmatpush1.msra.mxu0 0.0
    %201 = vmatprep.subr.mxu0 0.0
    %202 = vmatpush1.msra.mxu0 0.0
    %203 = vmatprep.subr.mxu0 0.0
    %204 = vmatpush1.msra.mxu0 0.0
    %205 = vmatprep.subr.mxu0 0.0
    %206 = vmatpush1.msra.mxu0 0.0
    %207 = vmatprep.subr.mxu0 0.0
    %208 = vmatpush1.msra.mxu0 0.0
    %209 = vmatprep.subr.mxu0 0.0
    %210 = vmatpush1.msra.mxu0 0.0
    %211 = vmatprep.subr.mxu0 0.0
    %212 = vmatpush1.msra.mxu0 0.0
    %213 = vmatprep.subr.mxu0 0.0
    %214 = vmatpush1.msra.mxu0 0.0
    %215 = vmatprep.subr.mxu0 0.0
    %216 = vmatpush1.msra.mxu0 0.0
    %217 = vmatprep.subr.mxu0 0.0
    %218 = vmatpush1.msra.mxu0 0.0
    %219 = vmatprep.subr.mxu0 0.0
    %220 = vmatpush1.msra.mxu0 0.0
    %221 = vmatprep.subr.mxu0 0.0
    %222 = vmatpush1.msra.mxu0 0.0
    %223 = vmatprep.subr.mxu0 0.0
    %224 = vmatpush1.msra.mxu0 0.0
    %225 = vmatprep.subr.mxu0 0.0
    %226 = vmatpush1.msra.mxu0 0.0
    %227 = vmatprep.mubr.f32.mxu0 0.0
    %228 = vmatmul.mubr.f32.gmra.mrb[0].mxu0 %v68
    %v229 = vpop.f32.mrb[0].mxu0
    %v230 = vadd.f32 0.0, %v229
    %v231 = vpop.f32.mrb[0].mxu0
    %232 = vmatprep.mubr.f32.mxu0 0.0
    %233 = vmatmul.mubr.f32.gmra.mrb[0].mxu0 %v71
    %v234 = vpop.f32.mrb[0].mxu0
    %v235 = vadd.f32 0.0, %v234
    %v236 = vpop.f32.mrb[0].mxu0
    %237 = vmatprep.mubr.f32.mxu0 0.0
    %238 = vmatmul.mubr.f32.gmra.mrb[0].mxu0 %v74
    %v239 = vpop.f32.mrb[0].mxu0
    %v240 = vadd.f32 0.0, %v239
    %v241 = vpop.f32.mrb[0].mxu0
    %242 = vmatprep.mubr.f32.mxu0 0.0
    %243 = vmatmul.mubr.f32.gmra.mrb[0].mxu0 %v77
    %v244 = vpop.f32.mrb[0].mxu0
    %v245 = vadd.f32 0.0, %v244
    %v246 = vpop.f32.mrb[0].mxu0
    %247 = vmatprep.mubr.f32.mxu0 0.0
    %248 = vmatmul.mubr.f32.gmra.mrb[0].mxu0 %v80
    %v249 = vpop.f32.mrb[0].mxu0
    %v250 = vadd.f32 0.0, %v249
    %v251 = vpop.f32.mrb[0].mxu0
    %252 = vmatprep.mubr.f32.mxu0 0.0
    %253 = vmatmul.mubr.f32.gmra.mrb[0].mxu0 %v83
    %v254 = vpop.f32.mrb[0].mxu0
    %v255 = vadd.f32 0.0, %v254
    %v256 = vpop.f32.mrb[0].mxu0
    %257 = vmatprep.mubr.f32.mxu0 0.0
    %258 = vmatmul.mubr.f32.gmra.mrb[0].mxu0 %v86
    %v259 = vpop.f32.mrb[0].mxu0
    %v260 = vadd.f32 0.0, %v259
    %v261 = vpop.f32.mrb[0].mxu0
    %262 = vmatprep.mubr.f32.mxu0 0.0
    %263 = vmatmul.mubr.f32.gmra.mrb[0].mxu0 %v89
    %v264 = vpop.f32.mrb[0].mxu0
    %v265 = vadd.f32 0.0, %v264
    %v266 = vpop.f32.mrb[0].mxu0
    %267 = vmatprep.mubr.f32.mxu0 0.0
    %268 = vmatmul.mubr.f32.gmra.mrb[0].mxu0 %v92
    %v269 = vpop.f32.mrb[0].mxu0
    %v270 = vadd.f32 0.0, %v269
    %v271 = vpop.f32.mrb[0].mxu0
    %272 = vmatprep.mubr.f32.mxu0 0.0
    %273 = vmatmul.mubr.f32.gmra.mrb[0].mxu0 %v95
    %v274 = vpop.f32.mrb[0].mxu0
    %v275 = vadd.f32 0.0, %v274
    %v276 = vpop.f32.mrb[0].mxu0
    %277 = vmatprep.mubr.f32.mxu0 0.0
    %278 = vmatmul.mubr.f32.gmra.mrb[0].mxu0 %v98
    %v279 = vpop.f32.mrb[0].mxu0
    %v280 = vadd.f32 0.0, %v279
    %v281 = vpop.f32.mrb[0].mxu0
    %282 = vmatprep.mubr.f32.mxu0 0.0
    %283 = vmatmul.mubr.f32.gmra.mrb[0].mxu0 %v101
    %v284 = vpop.f32.mrb[0].mxu0
    %v285 = vadd.f32 0.0, %v284
    %v286 = vpop.f32.mrb[0].mxu0
    %287 = vmatprep.mubr.f32.mxu0 0.0
    %288 = vmatmul.mubr.f32.gmra.mrb[0].mxu0 %v104
    %v289 = vpop.f32.mrb[0].mxu0
    %v290 = vadd.f32 0.0, %v289
    %v291 = vpop.f32.mrb[0].mxu0
    %292 = vmatprep.mubr.f32.mxu0 0.0
    %293 = vmatmul.mubr.f32.gmra.mrb[0].mxu0 %v107
    %v294 = vpop.f32.mrb[0].mxu0
    %v295 = vadd.f32 0.0, %v294
    %v296 = vpop.f32.mrb[0].mxu0
    %297 = vmatprep.mubr.f32.mxu0 0.0
    %298 = vmatmul.mubr.f32.gmra.mrb[0].mxu0 %v110
    %v299 = vpop.f32.mrb[0].mxu0
    %v300 = vadd.f32 0.0, %v299
    %v301 = vpop.f32.mrb[0].mxu0
    %302 = vmatprep.mubr.f32.mxu0 0.0
    %303 = vmatmul.mubr.f32.gmra.mrb[0].mxu0 %v113
    %v304 = vpop.f32.mrb[0].mxu0
    %v305 = vadd.f32 0.0, %v304
    %v306 = vpop.f32.mrb[0].mxu0
    %307 = vmatprep.mubr.f32.mxu0 0.0
    %308 = vmatmul.mubr.f32.gmra.mrb[0].mxu0 %v116
    %v309 = vpop.f32.mrb[0].mxu0
    %v310 = vadd.f32 0.0, %v309
    %v311 = vpop.f32.mrb[0].mxu0
    %312 = vmatprep.mubr.f32.mxu0 0.0
    %313 = vmatmul.mubr.f32.gmra.mrb[0].mxu0 %v119
    %v314 = vpop.f32.mrb[0].mxu0
    %v315 = vadd.f32 0.0, %v314
    %v316 = vpop.f32.mrb[0].mxu0
    %317 = vmatprep.mubr.f32.mxu0 0.0
    %318 = vmatmul.mubr.f32.gmra.mrb[0].mxu0 %v122
    %v319 = vpop.f32.mrb[0].mxu0
    %v320 = vadd.f32 0.0, %v319
    %v321 = vpop.f32.mrb[0].mxu0
    %322 = vmatprep.mubr.f32.mxu0 0.0
    %323 = vmatmul.mubr.f32.gmra.mrb[0].mxu0 %v125
    %v324 = vpop.f32.mrb[0].mxu0
    %v325 = vadd.f32 0.0, %v324
    %v326 = vpop.f32.mrb[0].mxu0
    %327 = vmatprep.mubr.f32.mxu0 0.0
    %328 = vmatmul.mubr.f32.gmra.mrb[0].mxu0 %v128
    %v329 = vpop.f32.mrb[0].mxu0
    %v330 = vadd.f32 0.0, %v329
    %v331 = vpop.f32.mrb[0].mxu0
    %332 = vmatprep.mubr.f32.mxu0 0.0
    %333 = vmatmul.mubr.f32.gmra.mrb[0].mxu0 %v131
    %v334 = vpop.f32.mrb[0].mxu0
    %v335 = vadd.f32 0.0, %v334
    %v336 = vpop.f32.mrb[0].mxu0
    %337 = vmatprep.mubr.f32.mxu0 0.0
    %338 = vmatmul.mubr.f32.gmra.mrb[0].mxu0 %v134
    %v339 = vpop.f32.mrb[0].mxu0
    %v340 = vadd.f32 0.0, %v339
    %v341 = vpop.f32.mrb[0].mxu0
    %342 = vmatprep.mubr.f32.mxu0 0.0
    %343 = vmatmul.mubr.f32.gmra.mrb[0].mxu0 %v137
    %v344 = vpop.f32.mrb[0].mxu0
    %v345 = vadd.f32 0.0, %v344
    %v346 = vpop.f32.mrb[0].mxu0
    %347 = vmatprep.mubr.f32.mxu0 0.0
    %348 = vmatmul.mubr.f32.gmra.mrb[0].mxu0 %v140
    %v349 = vpop.f32.mrb[0].mxu0
    %v350 = vadd.f32 0.0, %v349
    %v351 = vpop.f32.mrb[0].mxu0
    %352 = vmatprep.mubr.f32.mxu0 0.0
    %353 = vmatmul.mubr.f32.gmra.mrb[0].mxu0 %v143
    %v354 = vpop.f32.mrb[0].mxu0
    %v355 = vadd.f32 0.0, %v354
    %v356 = vpop.f32.mrb[0].mxu0
    %357 = vmatprep.mubr.f32.mxu0 0.0
    %358 = vmatmul.mubr.f32.gmra.mrb[0].mxu0 %v146
    %v359 = vpop.f32.mrb[0].mxu0
    %v360 = vadd.f32 0.0, %v359
    %v361 = vpop.f32.mrb[0].mxu0
    %362 = vmatprep.mubr.f32.mxu0 0.0
    %363 = vmatmul.mubr.f32.gmra.mrb[0].mxu0 %v149
    %v364 = vpop.f32.mrb[0].mxu0
    %v365 = vadd.f32 0.0, %v364
    %v366 = vpop.f32.mrb[0].mxu0
    %367 = vmatprep.mubr.f32.mxu0 0.0
    %368 = vmatmul.mubr.f32.gmra.mrb[0].mxu0 %v152
    %v369 = vpop.f32.mrb[0].mxu0
    %v370 = vadd.f32 0.0, %v369
    %v371 = vpop.f32.mrb[0].mxu0
    %372 = vmatprep.mubr.f32.mxu0 0.0
    %373 = vmatmul.mubr.f32.gmra.mrb[0].mxu0 %v155
    %v374 = vpop.f32.mrb[0].mxu0
    %v375 = vadd.f32 0.0, %v374
    %v376 = vpop.f32.mrb[0].mxu0
    %377 = vmatprep.mubr.f32.mxu0 0.0
    %378 = vmatmul.mubr.f32.gmra.mrb[0].mxu0 %v158
    %v379 = vpop.f32.mrb[0].mxu0
    %v380 = vadd.f32 0.0, %v379
    %v381 = vpop.f32.mrb[0].mxu0
    %382 = vmatprep.mubr.f32.mxu0 0.0
    %383 = vmatmul.mubr.f32.gmra.mrb[0].mxu0 %v161
    %v384 = vpop.f32.mrb[0].mxu0
    %v385 = vadd.f32 0.0, %v384
    %v386 = vpop.f32.mrb[0].mxu0
    %387 = vdwg.mxu0
    %388 = vmatprep.subr.mxu0 0.0
    %389 = vmatpush1.xpose.msra.mxu0 %v68
    %390 = vmatprep.subr.mxu0 0.0
    %391 = vmatpush1.xpose.msra.mxu0 %v71
    %392 = vmatprep.subr.mxu0 0.0
    %393 = vmatpush1.xpose.msra.mxu0 %v74
    %394 = vmatprep.subr.mxu0 0.0
    %395 = vmatpush1.xpose.msra.mxu0 %v77
    %396 = vmatprep.subr.mxu0 0.0
    %397 = vmatpush1.xpose.msra.mxu0 %v80
    %398 = vmatprep.subr.mxu0 0.0
    %399 = vmatpush1.xpose.msra.mxu0 %v83
    %400 = vmatprep.subr.mxu0 0.0
    %401 = vmatpush1.xpose.msra.mxu0 %v86
    %402 = vmatprep.subr.mxu0 0.0
    %403 = vmatpush1.xpose.msra.mxu0 %v89
    %404 = vmatprep.subr.mxu0 0.0
    %405 = vmatpush1.xpose.msra.mxu0 %v92
    %406 = vmatprep.subr.mxu0 0.0
    %407 = vmatpush1.xpose.msra.mxu0 %v95
    %408 = vmatprep.subr.mxu0 0.0
    %409 = vmatpush1.xpose.msra.mxu0 %v98
    %410 = vmatprep.subr.mxu0 0.0
    %411 = vmatpush1.xpose.msra.mxu0 %v101
    %412 = vmatprep.subr.mxu0 0.0
    %413 = vmatpush1.xpose.msra.mxu0 %v104
    %414 = vmatprep.subr.mxu0 0.0
    %415 = vmatpush1.xpose.msra.mxu0 %v107
    %416 = vmatprep.subr.mxu0 0.0
    %417 = vmatpush1.xpose.msra.mxu0 %v110
    %418 = vmatprep.subr.mxu0 0.0
    %419 = vmatpush1.xpose.msra.mxu0 %v113
    %420 = vmatprep.subr.mxu0 0.0
    %421 = vmatpush1.xpose.msra.mxu0 0.0
    %422 = vmatprep.subr.mxu0 0.0
    %423 = vmatpush1.xpose.msra.mxu0 0.0
    %424 = vmatprep.subr.mxu0 0.0
    %425 = vmatpush1.xpose.msra.mxu0 0.0
    %426 = vmatprep.subr.mxu0 0.0
    %427 = vmatpush1.xpose.msra.mxu0 0.0
    %428 = vmatprep.subr.mxu0 0.0
    %429 = vmatpush1.xpose.msra.mxu0 0.0
    %430 = vmatprep.subr.mxu0 0.0
    %431 = vmatpush1.xpose.msra.mxu0 0.0
    %432 = vmatprep.subr.mxu0 0.0
    %433 = vmatpush1.xpose.msra.mxu0 0.0
    %434 = vmatprep.subr.mxu0 0.0
    %435 = vmatpush1.xpose.msra.mxu0 0.0
    %436 = vmatprep.subr.mxu0 0.0
    %437 = vmatpush1.xpose.msra.mxu0 0.0
    %438 = vmatprep.subr.mxu0 0.0
    %439 = vmatpush1.xpose.msra.mxu0 0.0
    %440 = vmatprep.subr.mxu0 0.0
    %441 = vmatpush1.xpose.msra.mxu0 0.0
    %442 = vmatprep.subr.mxu0 0.0
    %443 = vmatpush1.xpose.msra.mxu0 0.0
    %444 = vmatprep.subr.mxu0 0.0
    %445 = vmatpush1.xpose.msra.mxu0 0.0
    %446 = vmatprep.subr.mxu0 0.0
    %447 = vmatpush1.xpose.msra.mxu0 0.0
    %448 = vmatprep.subr.mxu0 0.0
    %449 = vmatpush1.xpose.msra.mxu0 0.0
    %450 = vmatprep.subr.mxu0 0.0
    %451 = vmatpush1.xpose.msra.mxu0 0.0
    %452 = vmatprep.mubr.f32.mxu0 0.0
    %453 = vmatmul.mubr.f32.gmra.mrb[0].mxu0 %v68
    %v454 = vpop.f32.mrb[0].mxu0
    %v455 = vadd.f32 0.0, %v454
    %v456 = vpop.f32.mrb[0].mxu0
    %457 = vmatprep.mubr.f32.mxu0 0.0
    %458 = vmatmul.mubr.f32.gmra.mrb[0].mxu0 %v71
    %v459 = vpop.f32.mrb[0].mxu0
    %v460 = vadd.f32 0.0, %v459
    %v461 = vpop.f32.mrb[0].mxu0
    %462 = vmatprep.mubr.f32.mxu0 0.0
    %463 = vmatmul.mubr.f32.gmra.mrb[0].mxu0 %v74
    %v464 = vpop.f32.mrb[0].mxu0
    %v465 = vadd.f32 0.0, %v464
    %v466 = vpop.f32.mrb[0].mxu0
    %467 = vmatprep.mubr.f32.mxu0 0.0
    %468 = vmatmul.mubr.f32.gmra.mrb[0].mxu0 %v77
    %v469 = vpop.f32.mrb[0].mxu0
    %v470 = vadd.f32 0.0, %v469
    %v471 = vpop.f32.mrb[0].mxu0
    %472 = vmatprep.mubr.f32.mxu0 0.0
    %473 = vmatmul.mubr.f32.gmra.mrb[0].mxu0 %v80
    %v474 = vpop.f32.mrb[0].mxu0
    %v475 = vadd.f32 0.0, %v474
    %v476 = vpop.f32.mrb[0].mxu0
    %477 = vmatprep.mubr.f32.mxu0 0.0
    %478 = vmatmul.mubr.f32.gmra.mrb[0].mxu0 %v83
    %v479 = vpop.f32.mrb[0].mxu0
    %v480 = vadd.f32 0.0, %v479
    %v481 = vpop.f32.mrb[0].mxu0
    %482 = vmatprep.mubr.f32.mxu0 0.0
    %483 = vmatmul.mubr.f32.gmra.mrb[0].mxu0 %v86
    %v484 = vpop.f32.mrb[0].mxu0
    %v485 = vadd.f32 0.0, %v484
    %v486 = vpop.f32.mrb[0].mxu0
    %487 = vmatprep.mubr.f32.mxu0 0.0
    %488 = vmatmul.mubr.f32.gmra.mrb[0].mxu0 %v89
    %v489 = vpop.f32.mrb[0].mxu0
    %v490 = vadd.f32 0.0, %v489
    %v491 = vpop.f32.mrb[0].mxu0
    %492 = vmatprep.mubr.f32.mxu0 0.0
    %493 = vmatmul.mubr.f32.gmra.mrb[0].mxu0 %v92
    %v494 = vpop.f32.mrb[0].mxu0
    %v495 = vadd.f32 0.0, %v494
    %v496 = vpop.f32.mrb[0].mxu0
    %497 = vmatprep.mubr.f32.mxu0 0.0
    %498 = vmatmul.mubr.f32.gmra.mrb[0].mxu0 %v95
    %v499 = vpop.f32.mrb[0].mxu0
    %v500 = vadd.f32 0.0, %v499
    %v501 = vpop.f32.mrb[0].mxu0
    %502 = vmatprep.mubr.f32.mxu0 0.0
    %503 = vmatmul.mubr.f32.gmra.mrb[0].mxu0 %v98
    %v504 = vpop.f32.mrb[0].mxu0
    %v505 = vadd.f32 0.0, %v504
    %v506 = vpop.f32.mrb[0].mxu0
    %507 = vmatprep.mubr.f32.mxu0 0.0
    %508 = vmatmul.mubr.f32.gmra.mrb[0].mxu0 %v101
    %v509 = vpop.f32.mrb[0].mxu0
    %v510 = vadd.f32 0.0, %v509
    %v511 = vpop.f32.mrb[0].mxu0
    %512 = vmatprep.mubr.f32.mxu0 0.0
    %513 = vmatmul.mubr.f32.gmra.mrb[0].mxu0 %v104
    %v514 = vpop.f32.mrb[0].mxu0
    %v515 = vadd.f32 0.0, %v514
    %v516 = vpop.f32.mrb[0].mxu0
    %517 = vmatprep.mubr.f32.mxu0 0.0
    %518 = vmatmul.mubr.f32.gmra.mrb[0].mxu0 %v107
    %v519 = vpop.f32.mrb[0].mxu0
    %v520 = vadd.f32 0.0, %v519
    %v521 = vpop.f32.mrb[0].mxu0
    %522 = vmatprep.mubr.f32.mxu0 0.0
    %523 = vmatmul.mubr.f32.gmra.mrb[0].mxu0 %v110
    %v524 = vpop.f32.mrb[0].mxu0
    %v525 = vadd.f32 0.0, %v524
    %v526 = vpop.f32.mrb[0].mxu0
    %527 = vmatprep.mubr.f32.mxu0 0.0
    %528 = vmatmul.mubr.f32.gmra.mrb[0].mxu0 %v113
    %v529 = vpop.f32.mrb[0].mxu0
    %v530 = vadd.f32 0.0, %v529
    %v531 = vpop.f32.mrb[0].mxu0
    %532 = vdwg.mxu0
    %533 = vmatprep.subr.mxu0 0.0
    %534 = vmatpush1.xpose.msra.mxu0 %v116
    %535 = vmatprep.subr.mxu0 0.0
    %536 = vmatpush1.xpose.msra.mxu0 %v119
    %537 = vmatprep.subr.mxu0 0.0
    %538 = vmatpush1.xpose.msra.mxu0 %v122
    %539 = vmatprep.subr.mxu0 0.0
    %540 = vmatpush1.xpose.msra.mxu0 %v125
    %541 = vmatprep.subr.mxu0 0.0
    %542 = vmatpush1.xpose.msra.mxu0 %v128
    %543 = vmatprep.subr.mxu0 0.0
    %544 = vmatpush1.xpose.msra.mxu0 %v131
    %545 = vmatprep.subr.mxu0 0.0
    %546 = vmatpush1.xpose.msra.mxu0 %v134
    %547 = vmatprep.subr.mxu0 0.0
    %548 = vmatpush1.xpose.msra.mxu0 %v137
    %549 = vmatprep.subr.mxu0 0.0
    %550 = vmatpush1.xpose.msra.mxu0 %v140
    %551 = vmatprep.subr.mxu0 0.0
    %552 = vmatpush1.xpose.msra.mxu0 %v143
    %553 = vmatprep.subr.mxu0 0.0
    %554 = vmatpush1.xpose.msra.mxu0 %v146
    %555 = vmatprep.subr.mxu0 0.0
    %556 = vmatpush1.xpose.msra.mxu0 %v149
    %557 = vmatprep.subr.mxu0 0.0
    %558 = vmatpush1.xpose.msra.mxu0 %v152
    %559 = vmatprep.subr.mxu0 0.0
    %560 = vmatpush1.xpose.msra.mxu0 %v155
    %561 = vmatprep.subr.mxu0 0.0
    %562 = vmatpush1.xpose.msra.mxu0 %v158
    %563 = vmatprep.subr.mxu0 0.0
    %564 = vmatpush1.xpose.msra.mxu0 %v161
    %565 = vmatprep.subr.mxu0 0.0
    %566 = vmatpush1.xpose.msra.mxu0 0.0
    %567 = vmatprep.subr.mxu0 0.0
    %568 = vmatpush1.xpose.msra.mxu0 0.0
    %569 = vmatprep.subr.mxu0 0.0
    %570 = vmatpush1.xpose.msra.mxu0 0.0
    %571 = vmatprep.subr.mxu0 0.0
    %572 = vmatpush1.xpose.msra.mxu0 0.0
    %573 = vmatprep.subr.mxu0 0.0
    %574 = vmatpush1.xpose.msra.mxu0 0.0
    %575 = vmatprep.subr.mxu0 0.0
    %576 = vmatpush1.xpose.msra.mxu0 0.0
    %577 = vmatprep.subr.mxu0 0.0
    %578 = vmatpush1.xpose.msra.mxu0 0.0
    %579 = vmatprep.subr.mxu0 0.0
    %580 = vmatpush1.xpose.msra.mxu0 0.0
    %581 = vmatprep.subr.mxu0 0.0
    %582 = vmatpush1.xpose.msra.mxu0 0.0
    %583 = vmatprep.subr.mxu0 0.0
    %584 = vmatpush1.xpose.msra.mxu0 0.0
    %585 = vmatprep.subr.mxu0 0.0
    %586 = vmatpush1.xpose.msra.mxu0 0.0
    %587 = vmatprep.subr.mxu0 0.0
    %588 = vmatpush1.xpose.msra.mxu0 0.0
    %589 = vmatprep.subr.mxu0 0.0
    %590 = vmatpush1.xpose.msra.mxu0 0.0
    %591 = vmatprep.subr.mxu0 0.0
    %592 = vmatpush1.xpose.msra.mxu0 0.0
    %593 = vmatprep.subr.mxu0 0.0
    %594 = vmatpush1.xpose.msra.mxu0 0.0
    %595 = vmatprep.subr.mxu0 0.0
    %596 = vmatpush1.xpose.msra.mxu0 0.0
    %597 = vmatprep.mubr.f32.mxu0 0.0
    %598 = vmatmul.mubr.f32.gmra.mrb[0].mxu0 %v116
    %v599 = vpop.f32.mrb[0].mxu0
    %v600 = vadd.f32 0.0, %v599
    %v601 = vpop.f32.mrb[0].mxu0
    %602 = vmatprep.mubr.f32.mxu0 0.0
    %603 = vmatmul.mubr.f32.gmra.mrb[0].mxu0 %v119
    %v604 = vpop.f32.mrb[0].mxu0
    %v605 = vadd.f32 0.0, %v604
    %v606 = vpop.f32.mrb[0].mxu0
    %607 = vmatprep.mubr.f32.mxu0 0.0
    %608 = vmatmul.mubr.f32.gmra.mrb[0].mxu0 %v122
    %v609 = vpop.f32.mrb[0].mxu0
    %v610 = vadd.f32 0.0, %v609
    %v611 = vpop.f32.mrb[0].mxu0
    %612 = vmatprep.mubr.f32.mxu0 0.0
    %613 = vmatmul.mubr.f32.gmra.mrb[0].mxu0 %v125
    %v614 = vpop.f32.mrb[0].mxu0
    %v615 = vadd.f32 0.0, %v614
    %v616 = vpop.f32.mrb[0].mxu0
    %617 = vmatprep.mubr.f32.mxu0 0.0
    %618 = vmatmul.mubr.f32.gmra.mrb[0].mxu0 %v128
    %v619 = vpop.f32.mrb[0].mxu0
    %v620 = vadd.f32 0.0, %v619
    %v621 = vpop.f32.mrb[0].mxu0
    %622 = vmatprep.mubr.f32.mxu0 0.0
    %623 = vmatmul.mubr.f32.gmra.mrb[0].mxu0 %v131
    %v624 = vpop.f32.mrb[0].mxu0
    %v625 = vadd.f32 0.0, %v624
    %v626 = vpop.f32.mrb[0].mxu0
    %627 = vmatprep.mubr.f32.mxu0 0.0
    %628 = vmatmul.mubr.f32.gmra.mrb[0].mxu0 %v134
    %v629 = vpop.f32.mrb[0].mxu0
    %v630 = vadd.f32 0.0, %v629
    %v631 = vpop.f32.mrb[0].mxu0
    %632 = vmatprep.mubr.f32.mxu0 0.0
    %633 = vmatmul.mubr.f32.gmra.mrb[0].mxu0 %v137
    %v634 = vpop.f32.mrb[0].mxu0
    %v635 = vadd.f32 0.0, %v634
    %v636 = vpop.f32.mrb[0].mxu0
    %637 = vmatprep.mubr.f32.mxu0 0.0
    %638 = vmatmul.mubr.f32.gmra.mrb[0].mxu0 %v140
    %v639 = vpop.f32.mrb[0].mxu0
    %v640 = vadd.f32 0.0, %v639
    %v641 = vpop.f32.mrb[0].mxu0
    %642 = vmatprep.mubr.f32.mxu0 0.0
    %643 = vmatmul.mubr.f32.gmra.mrb[0].mxu0 %v143
    %v644 = vpop.f32.mrb[0].mxu0
    %v645 = vadd.f32 0.0, %v644
    %v646 = vpop.f32.mrb[0].mxu0
    %647 = vmatprep.mubr.f32.mxu0 0.0
    %648 = vmatmul.mubr.f32.gmra.mrb[0].mxu0 %v146
    %v649 = vpop.f32.mrb[0].mxu0
    %v650 = vadd.f32 0.0, %v649
    %v651 = vpop.f32.mrb[0].mxu0
    %652 = vmatprep.mubr.f32.mxu0 0.0
    %653 = vmatmul.mubr.f32.gmra.mrb[0].mxu0 %v149
    %v654 = vpop.f32.mrb[0].mxu0
    %v655 = vadd.f32 0.0, %v654
    %v656 = vpop.f32.mrb[0].mxu0
    %657 = vmatprep.mubr.f32.mxu0 0.0
    %658 = vmatmul.mubr.f32.gmra.mrb[0].mxu0 %v152
    %v659 = vpop.f32.mrb[0].mxu0
    %v660 = vadd.f32 0.0, %v659
    %v661 = vpop.f32.mrb[0].mxu0
    %662 = vmatprep.mubr.f32.mxu0 0.0
    %663 = vmatmul.mubr.f32.gmra.mrb[0].mxu0 %v155
    %v664 = vpop.f32.mrb[0].mxu0
    %v665 = vadd.f32 0.0, %v664
    %v666 = vpop.f32.mrb[0].mxu0
    %667 = vmatprep.mubr.f32.mxu0 0.0
    %668 = vmatmul.mubr.f32.gmra.mrb[0].mxu0 %v158
    %v669 = vpop.f32.mrb[0].mxu0
    %v670 = vadd.f32 0.0, %v669
    %v671 = vpop.f32.mrb[0].mxu0
    %672 = vmatprep.mubr.f32.mxu0 0.0
    %673 = vmatmul.mubr.f32.gmra.mrb[0].mxu0 %v161
    %v674 = vpop.f32.mrb[0].mxu0
    %v675 = vadd.f32 0.0, %v674
    %v676 = vpop.f32.mrb[0].mxu0
    %677 = vdwg.mxu0
    %678 = vmatprep.subr.mxu0 0.0
    %679 = vmatpush1.msra.mxu0 %v230
    %680 = vmatprep.subr.mxu0 0.0
    %681 = vmatpush1.msra.mxu0 %v235
    %682 = vmatprep.subr.mxu0 0.0
    %683 = vmatpush1.msra.mxu0 %v240
    %684 = vmatprep.subr.mxu0 0.0
    %685 = vmatpush1.msra.mxu0 %v245
    %686 = vmatprep.subr.mxu0 0.0
    %687 = vmatpush1.msra.mxu0 %v250
    %688 = vmatprep.subr.mxu0 0.0
    %689 = vmatpush1.msra.mxu0 %v255
    %690 = vmatprep.subr.mxu0 0.0
    %691 = vmatpush1.msra.mxu0 %v260
    %692 = vmatprep.subr.mxu0 0.0
    %693 = vmatpush1.msra.mxu0 %v265
    %694 = vmatprep.subr.mxu0 0.0
    %695 = vmatpush1.msra.mxu0 %v270
    %696 = vmatprep.subr.mxu0 0.0
    %697 = vmatpush1.msra.mxu0 %v275
    %698 = vmatprep.subr.mxu0 0.0
    %699 = vmatpush1.msra.mxu0 %v280
    %700 = vmatprep.subr.mxu0 0.0
    %701 = vmatpush1.msra.mxu0 %v285
    %702 = vmatprep.subr.mxu0 0.0
    %703 = vmatpush1.msra.mxu0 %v290
    %704 = vmatprep.subr.mxu0 0.0
    %705 = vmatpush1.msra.mxu0 %v295
    %706 = vmatprep.subr.mxu0 0.0
    %707 = vmatpush1.msra.mxu0 %v300
    %708 = vmatprep.subr.mxu0 0.0
    %709 = vmatpush1.msra.mxu0 %v305
    %710 = vmatprep.subr.mxu0 0.0
    %711 = vmatpush1.msra.mxu0 0.0
    %712 = vmatprep.subr.mxu0 0.0
    %713 = vmatpush1.msra.mxu0 0.0
    %714 = vmatprep.subr.mxu0 0.0
    %715 = vmatpush1.msra.mxu0 0.0
    %716 = vmatprep.subr.mxu0 0.0
    %717 = vmatpush1.msra.mxu0 0.0
    %718 = vmatprep.subr.mxu0 0.0
    %719 = vmatpush1.msra.mxu0 0.0
    %720 = vmatprep.subr.mxu0 0.0
    %721 = vmatpush1.msra.mxu0 0.0
    %722 = vmatprep.subr.mxu0 0.0
    %723 = vmatpush1.msra.mxu0 0.0
    %724 = vmatprep.subr.mxu0 0.0
    %725 = vmatpush1.msra.mxu0 0.0
    %726 = vmatprep.subr.mxu0 0.0
    %727 = vmatpush1.msra.mxu0 0.0
    %728 = vmatprep.subr.mxu0 0.0
    %729 = vmatpush1.msra.mxu0 0.0
    %730 = vmatprep.subr.mxu0 0.0
    %731 = vmatpush1.msra.mxu0 0.0
    %732 = vmatprep.subr.mxu0 0.0
    %733 = vmatpush1.msra.mxu0 0.0
    %734 = vmatprep.subr.mxu0 0.0
    %735 = vmatpush1.msra.mxu0 0.0
    %736 = vmatprep.subr.mxu0 0.0
    %737 = vmatpush1.msra.mxu0 0.0
    %738 = vmatprep.subr.mxu0 0.0
    %739 = vmatpush1.msra.mxu0 0.0
    %740 = vmatprep.subr.mxu0 0.0
    %741 = vmatpush1.msra.mxu0 0.0
    %742 = vmatprep.mubr.f32.mxu0 0.0
    %743 = vmatmul.mubr.f32.gmra.mrb[0].mxu0 %v455
    %v744 = vpop.f32.mrb[0].mxu0
    %v745 = vadd.f32 0.0, %v744
    %v746 = vpop.f32.mrb[0].mxu0
    %747 = vmatprep.mubr.f32.mxu0 0.0
    %748 = vmatmul.mubr.f32.gmra.mrb[0].mxu0 %v460
    %v749 = vpop.f32.mrb[0].mxu0
    %v750 = vadd.f32 0.0, %v749
    %v751 = vpop.f32.mrb[0].mxu0
    %752 = vmatprep.mubr.f32.mxu0 0.0
    %753 = vmatmul.mubr.f32.gmra.mrb[0].mxu0 %v465
    %v754 = vpop.f32.mrb[0].mxu0
    %v755 = vadd.f32 0.0, %v754
    %v756 = vpop.f32.mrb[0].mxu0
    %757 = vmatprep.mubr.f32.mxu0 0.0
    %758 = vmatmul.mubr.f32.gmra.mrb[0].mxu0 %v470
    %v759 = vpop.f32.mrb[0].mxu0
    %v760 = vadd.f32 0.0, %v759
    %v761 = vpop.f32.mrb[0].mxu0
    %762 = vmatprep.mubr.f32.mxu0 0.0
    %763 = vmatmul.mubr.f32.gmra.mrb[0].mxu0 %v475
    %v764 = vpop.f32.mrb[0].mxu0
    %v765 = vadd.f32 0.0, %v764
    %v766 = vpop.f32.mrb[0].mxu0
    %767 = vmatprep.mubr.f32.mxu0 0.0
    %768 = vmatmul.mubr.f32.gmra.mrb[0].mxu0 %v480
    %v769 = vpop.f32.mrb[0].mxu0
    %v770 = vadd.f32 0.0, %v769
    %v771 = vpop.f32.mrb[0].mxu0
    %772 = vmatprep.mubr.f32.mxu0 0.0
    %773 = vmatmul.mubr.f32.gmra.mrb[0].mxu0 %v485
    %v774 = vpop.f32.mrb[0].mxu0
    %v775 = vadd.f32 0.0, %v774
    %v776 = vpop.f32.mrb[0].mxu0
    %777 = vmatprep.mubr.f32.mxu0 0.0
    %778 = vmatmul.mubr.f32.gmra.mrb[0].mxu0 %v490
    %v779 = vpop.f32.mrb[0].mxu0
    %v780 = vadd.f32 0.0, %v779
    %v781 = vpop.f32.mrb[0].mxu0
    %782 = vmatprep.mubr.f32.mxu0 0.0
    %783 = vmatmul.mubr.f32.gmra.mrb[0].mxu0 %v495
    %v784 = vpop.f32.mrb[0].mxu0
    %v785 = vadd.f32 0.0, %v784
    %v786 = vpop.f32.mrb[0].mxu0
    %787 = vmatprep.mubr.f32.mxu0 0.0
    %788 = vmatmul.mubr.f32.gmra.mrb[0].mxu0 %v500
    %v789 = vpop.f32.mrb[0].mxu0
    %v790 = vadd.f32 0.0, %v789
    %v791 = vpop.f32.mrb[0].mxu0
    %792 = vmatprep.mubr.f32.mxu0 0.0
    %793 = vmatmul.mubr.f32.gmra.mrb[0].mxu0 %v505
    %v794 = vpop.f32.mrb[0].mxu0
    %v795 = vadd.f32 0.0, %v794
    %v796 = vpop.f32.mrb[0].mxu0
    %797 = vmatprep.mubr.f32.mxu0 0.0
    %798 = vmatmul.mubr.f32.gmra.mrb[0].mxu0 %v510
    %v799 = vpop.f32.mrb[0].mxu0
    %v800 = vadd.f32 0.0, %v799
    %v801 = vpop.f32.mrb[0].mxu0
    %802 = vmatprep.mubr.f32.mxu0 0.0
    %803 = vmatmul.mubr.f32.gmra.mrb[0].mxu0 %v515
    %v804 = vpop.f32.mrb[0].mxu0
    %v805 = vadd.f32 0.0, %v804
    %v806 = vpop.f32.mrb[0].mxu0
    %807 = vmatprep.mubr.f32.mxu0 0.0
    %808 = vmatmul.mubr.f32.gmra.mrb[0].mxu0 %v520
    %v809 = vpop.f32.mrb[0].mxu0
    %v810 = vadd.f32 0.0, %v809
    %v811 = vpop.f32.mrb[0].mxu0
    %812 = vmatprep.mubr.f32.mxu0 0.0
    %813 = vmatmul.mubr.f32.gmra.mrb[0].mxu0 %v525
    %v814 = vpop.f32.mrb[0].mxu0
    %v815 = vadd.f32 0.0, %v814
    %v816 = vpop.f32.mrb[0].mxu0
    %817 = vmatprep.mubr.f32.mxu0 0.0
    %818 = vmatmul.mubr.f32.gmra.mrb[0].mxu0 %v530
    %v819 = vpop.f32.mrb[0].mxu0
    %v820 = vadd.f32 0.0, %v819
    %v821 = vpop.f32.mrb[0].mxu0
    %822 = vdwg.mxu0
    %823 = vmatprep.subr.mxu0 0.0
    %824 = vmatpush1.msra.mxu0 %v310
    %825 = vmatprep.subr.mxu0 0.0
    %826 = vmatpush1.msra.mxu0 %v315
    %827 = vmatprep.subr.mxu0 0.0
    %828 = vmatpush1.msra.mxu0 %v320
    %829 = vmatprep.subr.mxu0 0.0
    %830 = vmatpush1.msra.mxu0 %v325
    %831 = vmatprep.subr.mxu0 0.0
    %832 = vmatpush1.msra.mxu0 %v330
    %833 = vmatprep.subr.mxu0 0.0
    %834 = vmatpush1.msra.mxu0 %v335
    %835 = vmatprep.subr.mxu0 0.0
    %836 = vmatpush1.msra.mxu0 %v340
    %837 = vmatprep.subr.mxu0 0.0
    %838 = vmatpush1.msra.mxu0 %v345
    %839 = vmatprep.subr.mxu0 0.0
    %840 = vmatpush1.msra.mxu0 %v350
    %841 = vmatprep.subr.mxu0 0.0
    %842 = vmatpush1.msra.mxu0 %v355
    %843 = vmatprep.subr.mxu0 0.0
    %844 = vmatpush1.msra.mxu0 %v360
    %845 = vmatprep.subr.mxu0 0.0
    %846 = vmatpush1.msra.mxu0 %v365
    %847 = vmatprep.subr.mxu0 0.0
    %848 = vmatpush1.msra.mxu0 %v370
    %849 = vmatprep.subr.mxu0 0.0
    %850 = vmatpush1.msra.mxu0 %v375
    %851 = vmatprep.subr.mxu0 0.0
    %852 = vmatpush1.msra.mxu0 %v380
    %853 = vmatprep.subr.mxu0 0.0
    %854 = vmatpush1.msra.mxu0 %v385
    %855 = vmatprep.subr.mxu0 0.0
    %856 = vmatpush1.msra.mxu0 0.0
    %857 = vmatprep.subr.mxu0 0.0
    %858 = vmatpush1.msra.mxu0 0.0
    %859 = vmatprep.subr.mxu0 0.0
    %860 = vmatpush1.msra.mxu0 0.0
    %861 = vmatprep.subr.mxu0 0.0
    %862 = vmatpush1.msra.mxu0 0.0
    %863 = vmatprep.subr.mxu0 0.0
    %864 = vmatpush1.msra.mxu0 0.0
    %865 = vmatprep.subr.mxu0 0.0
    %866 = vmatpush1.msra.mxu0 0.0
    %867 = vmatprep.subr.mxu0 0.0
    %868 = vmatpush1.msra.mxu0 0.0
    %869 = vmatprep.subr.mxu0 0.0
    %870 = vmatpush1.msra.mxu0 0.0
    %871 = vmatprep.subr.mxu0 0.0
    %872 = vmatpush1.msra.mxu0 0.0
    %873 = vmatprep.subr.mxu0 0.0
    %874 = vmatpush1.msra.mxu0 0.0
    %875 = vmatprep.subr.mxu0 0.0
    %876 = vmatpush1.msra.mxu0 0.0
    %877 = vmatprep.subr.mxu0 0.0
    %878 = vmatpush1.msra.mxu0 0.0
    %879 = vmatprep.subr.mxu0 0.0
    %880 = vmatpush1.msra.mxu0 0.0
    %881 = vmatprep.subr.mxu0 0.0
    %882 = vmatpush1.msra.mxu0 0.0
    %883 = vmatprep.subr.mxu0 0.0
    %884 = vmatpush1.msra.mxu0 0.0
    %885 = vmatprep.subr.mxu0 0.0
    %886 = vmatpush1.msra.mxu0 0.0
    %887 = vmatprep.mubr.f32.mxu0 0.0
    %888 = vmatmul.mubr.f32.gmra.mrb[0].mxu0 %v600
    %v889 = vpop.f32.mrb[0].mxu0
    %v890 = vadd.f32 0.0, %v889
    %v891 = vpop.f32.mrb[0].mxu0
    %892 = vmatprep.mubr.f32.mxu0 0.0
    %893 = vmatmul.mubr.f32.gmra.mrb[0].mxu0 %v605
    %v894 = vpop.f32.mrb[0].mxu0
    %v895 = vadd.f32 0.0, %v894
    %v896 = vpop.f32.mrb[0].mxu0
    %897 = vmatprep.mubr.f32.mxu0 0.0
    %898 = vmatmul.mubr.f32.gmra.mrb[0].mxu0 %v610
    %v899 = vpop.f32.mrb[0].mxu0
    %v900 = vadd.f32 0.0, %v899
    %v901 = vpop.f32.mrb[0].mxu0
    %902 = vmatprep.mubr.f32.mxu0 0.0
    %903 = vmatmul.mubr.f32.gmra.mrb[0].mxu0 %v615
    %v904 = vpop.f32.mrb[0].mxu0
    %v905 = vadd.f32 0.0, %v904
    %v906 = vpop.f32.mrb[0].mxu0
    %907 = vmatprep.mubr.f32.mxu0 0.0
    %908 = vmatmul.mubr.f32.gmra.mrb[0].mxu0 %v620
    %v909 = vpop.f32.mrb[0].mxu0
    %v910 = vadd.f32 0.0, %v909
    %v911 = vpop.f32.mrb[0].mxu0
    %912 = vmatprep.mubr.f32.mxu0 0.0
    %913 = vmatmul.mubr.f32.gmra.mrb[0].mxu0 %v625
    %v914 = vpop.f32.mrb[0].mxu0
    %v915 = vadd.f32 0.0, %v914
    %v916 = vpop.f32.mrb[0].mxu0
    %917 = vmatprep.mubr.f32.mxu0 0.0
    %918 = vmatmul.mubr.f32.gmra.mrb[0].mxu0 %v630
    %v919 = vpop.f32.mrb[0].mxu0
    %v920 = vadd.f32 0.0, %v919
    %v921 = vpop.f32.mrb[0].mxu0
    %922 = vmatprep.mubr.f32.mxu0 0.0
    %923 = vmatmul.mubr.f32.gmra.mrb[0].mxu0 %v635
    %v924 = vpop.f32.mrb[0].mxu0
    %v925 = vadd.f32 0.0, %v924
    %v926 = vpop.f32.mrb[0].mxu0
    %927 = vmatprep.mubr.f32.mxu0 0.0
    %928 = vmatmul.mubr.f32.gmra.mrb[0].mxu0 %v640
    %v929 = vpop.f32.mrb[0].mxu0
    %v930 = vadd.f32 0.0, %v929
    %v931 = vpop.f32.mrb[0].mxu0
    %932 = vmatprep.mubr.f32.mxu0 0.0
    %933 = vmatmul.mubr.f32.gmra.mrb[0].mxu0 %v645
    %v934 = vpop.f32.mrb[0].mxu0
    %v935 = vadd.f32 0.0, %v934
    %v936 = vpop.f32.mrb[0].mxu0
    %937 = vmatprep.mubr.f32.mxu0 0.0
    %938 = vmatmul.mubr.f32.gmra.mrb[0].mxu0 %v650
    %v939 = vpop.f32.mrb[0].mxu0
    %v940 = vadd.f32 0.0, %v939
    %v941 = vpop.f32.mrb[0].mxu0
    %942 = vmatprep.mubr.f32.mxu0 0.0
    %943 = vmatmul.mubr.f32.gmra.mrb[0].mxu0 %v655
    %v944 = vpop.f32.mrb[0].mxu0
    %v945 = vadd.f32 0.0, %v944
    %v946 = vpop.f32.mrb[0].mxu0
    %947 = vmatprep.mubr.f32.mxu0 0.0
    %948 = vmatmul.mubr.f32.gmra.mrb[0].mxu0 %v660
    %v949 = vpop.f32.mrb[0].mxu0
    %v950 = vadd.f32 0.0, %v949
    %v951 = vpop.f32.mrb[0].mxu0
    %952 = vmatprep.mubr.f32.mxu0 0.0
    %953 = vmatmul.mubr.f32.gmra.mrb[0].mxu0 %v665
    %v954 = vpop.f32.mrb[0].mxu0
    %v955 = vadd.f32 0.0, %v954
    %v956 = vpop.f32.mrb[0].mxu0
    %957 = vmatprep.mubr.f32.mxu0 0.0
    %958 = vmatmul.mubr.f32.gmra.mrb[0].mxu0 %v670
    %v959 = vpop.f32.mrb[0].mxu0
    %v960 = vadd.f32 0.0, %v959
    %v961 = vpop.f32.mrb[0].mxu0
    %962 = vmatprep.mubr.f32.mxu0 0.0
    %963 = vmatmul.mubr.f32.gmra.mrb[0].mxu0 %v675
    %v964 = vpop.f32.mrb[0].mxu0
    %v965 = vadd.f32 0.0, %v964
    %v966 = vpop.f32.mrb[0].mxu0
    %967 = vdwg.mxu0
    %v968 = vtanh.pop %v745
    %v969 = vtanh.pop %v750
    %v970 = vtanh.pop %v755
    %v971 = vtanh.pop %v760
    %v972 = vtanh.pop %v765
    %v973 = vtanh.pop %v770
    %v974 = vtanh.pop %v775
    %v975 = vtanh.pop %v780
    %v976 = vtanh.pop %v785
    %v977 = vtanh.pop %v790
    %v978 = vtanh.pop %v795
    %v979 = vtanh.pop %v800
    %v980 = vtanh.pop %v805
    %v981 = vtanh.pop %v810
    %v982 = vtanh.pop %v815
    %v983 = vtanh.pop %v820
    %v984 = vtanh.pop %v890
    %v985 = vtanh.pop %v895
    %v986 = vtanh.pop %v900
    %v987 = vtanh.pop %v905
    %v988 = vtanh.pop %v910
    %v989 = vtanh.pop %v915
    %v990 = vtanh.pop %v920
    %v991 = vtanh.pop %v925
    %v992 = vtanh.pop %v930
    %v993 = vtanh.pop %v935
    %v994 = vtanh.pop %v940
    %v995 = vtanh.pop %v945
    %v996 = vtanh.pop %v950
    %v997 = vtanh.pop %v955
    %v998 = vtanh.pop %v960
    %v999 = vtanh.pop %v965
    %vm1000 = vcmask 64512
    %v1002 = vsel %vm1000, %v60, 0
    %v1005 = vsel %vm1000, %v968, 0
    %v1008 = vsel %vm1000, %v969, 0
    %v1011 = vsel %vm1000, %v970, 0
    %v1014 = vsel %vm1000, %v971, 0
    %v1017 = vsel %vm1000, %v972, 0
    %v1020 = vsel %vm1000, %v973, 0
    %v1023 = vsel %vm1000, %v974, 0
    %v1026 = vsel %vm1000, %v975, 0
    %v1029 = vsel %vm1000, %v976, 0
    %v1032 = vsel %vm1000, %v977, 0
    %v1035 = vsel %vm1000, %v978, 0
    %v1038 = vsel %vm1000, %v979, 0
    %v1041 = vsel %vm1000, %v980, 0
    %v1044 = vsel %vm1000, %v981, 0
    %v1047 = vsel %vm1000, %v982, 0
    %v1050 = vsel %vm1000, %v983, 0
    %1052 = vmatprep.subr.mxu0 0.0
    %1053 = vmatpush1.xpose.msra.mxu0 %v1005
    %1054 = vmatprep.subr.mxu0 0.0
    %1055 = vmatpush1.xpose.msra.mxu0 %v1008
    %1056 = vmatprep.subr.mxu0 0.0
    %1057 = vmatpush1.xpose.msra.mxu0 %v1011
    %1058 = vmatprep.subr.mxu0 0.0
    %1059 = vmatpush1.xpose.msra.mxu0 %v1014
    %1060 = vmatprep.subr.mxu0 0.0
    %1061 = vmatpush1.xpose.msra.mxu0 %v1017
    %1062 = vmatprep.subr.mxu0 0.0
    %1063 = vmatpush1.xpose.msra.mxu0 %v1020
    %1064 = vmatprep.subr.mxu0 0.0
    %1065 = vmatpush1.xpose.msra.mxu0 %v1023
    %1066 = vmatprep.subr.mxu0 0.0
    %1067 = vmatpush1.xpose.msra.mxu0 %v1026
    %1068 = vmatprep.subr.mxu0 0.0
    %1069 = vmatpush1.xpose.msra.mxu0 %v1029
    %1070 = vmatprep.subr.mxu0 0.0
    %1071 = vmatpush1.xpose.msra.mxu0 %v1032
    %1072 = vmatprep.subr.mxu0 0.0
    %1073 = vmatpush1.xpose.msra.mxu0 %v1035
    %1074 = vmatprep.subr.mxu0 0.0
    %1075 = vmatpush1.xpose.msra.mxu0 %v1038
    %1076 = vmatprep.subr.mxu0 0.0
    %1077 = vmatpush1.xpose.msra.mxu0 %v1041
    %1078 = vmatprep.subr.mxu0 0.0
    %1079 = vmatpush1.xpose.msra.mxu0 %v1044
    %1080 = vmatprep.subr.mxu0 0.0
    %1081 = vmatpush1.xpose.msra.mxu0 %v1047
    %1082 = vmatprep.subr.mxu0 0.0
    %1083 = vmatpush1.xpose.msra.mxu0 %v1050
    %1084 = vmatprep.subr.mxu0 0.0
    %1085 = vmatpush1.xpose.msra.mxu0 0.0
    %1086 = vmatprep.subr.mxu0 0.0
    %1087 = vmatpush1.xpose.msra.mxu0 0.0
    %1088 = vmatprep.subr.mxu0 0.0
    %1089 = vmatpush1.xpose.msra.mxu0 0.0
    %1090 = vmatprep.subr.mxu0 0.0
    %1091 = vmatpush1.xpose.msra.mxu0 0.0
    %1092 = vmatprep.subr.mxu0 0.0
    %1093 = vmatpush1.xpose.msra.mxu0 0.0
    %1094 = vmatprep.subr.mxu0 0.0
    %1095 = vmatpush1.xpose.msra.mxu0 0.0
    %1096 = vmatprep.subr.mxu0 0.0
    %1097 = vmatpush1.xpose.msra.mxu0 0.0
    %1098 = vmatprep.subr.mxu0 0.0
    %1099 = vmatpush1.xpose.msra.mxu0 0.0
    %1100 = vmatprep.subr.mxu0 0.0
    %1101 = vmatpush1.xpose.msra.mxu0 0.0
    %1102 = vmatprep.subr.mxu0 0.0
    %1103 = vmatpush1.xpose.msra.mxu0 0.0
    %1104 = vmatprep.subr.mxu0 0.0
    %1105 = vmatpush1.xpose.msra.mxu0 0.0
    %1106 = vmatprep.subr.mxu0 0.0
    %1107 = vmatpush1.xpose.msra.mxu0 0.0
    %1108 = vmatprep.subr.mxu0 0.0
    %1109 = vmatpush1.xpose.msra.mxu0 0.0
    %1110 = vmatprep.subr.mxu0 0.0
    %1111 = vmatpush1.xpose.msra.mxu0 0.0
    %1112 = vmatprep.subr.mxu0 0.0
    %1113 = vmatpush1.xpose.msra.mxu0 0.0
    %1114 = vmatprep.subr.mxu0 0.0
    %1115 = vmatpush1.xpose.msra.mxu0 0.0
    %1116 = vmatprep.mubr.f32.mxu0 0.0
    %1117 = vmatmul.mubr.f32.gmra.mrb[0].mxu0 %v1002
    %v1118 = vpop.f32.mrb[0].mxu0
    %v1119 = vadd.f32 0.0, %v1118
    %v1120 = vpop.f32.mrb[0].mxu0
    %1121 = vdwg.mxu0
    %v1123 = vsel %vm1000, %v984, 0
    %v1126 = vsel %vm1000, %v985, 0
    %v1129 = vsel %vm1000, %v986, 0
    %v1132 = vsel %vm1000, %v987, 0
    %v1135 = vsel %vm1000, %v988, 0
    %v1138 = vsel %vm1000, %v989, 0
    %v1141 = vsel %vm1000, %v990, 0
    %v1144 = vsel %vm1000, %v991, 0
    %v1147 = vsel %vm1000, %v992, 0
    %v1150 = vsel %vm1000, %v993, 0
    %v1153 = vsel %vm1000, %v994, 0
    %v1156 = vsel %vm1000, %v995, 0
    %v1159 = vsel %vm1000, %v996, 0
    %v1162 = vsel %vm1000, %v997, 0
    %v1165 = vsel %vm1000, %v998, 0
    %v1168 = vsel %vm1000, %v999, 0
    %1170 = vmatprep.subr.mxu0 0.0
    %1171 = vmatpush1.xpose.msra.mxu0 %v1123
    %1172 = vmatprep.subr.mxu0 0.0
    %1173 = vmatpush1.xpose.msra.mxu0 %v1126
    %1174 = vmatprep.subr.mxu0 0.0
    %1175 = vmatpush1.xpose.msra.mxu0 %v1129
    %1176 = vmatprep.subr.mxu0 0.0
    %1177 = vmatpush1.xpose.msra.mxu0 %v1132
    %1178 = vmatprep.subr.mxu0 0.0
    %1179 = vmatpush1.xpose.msra.mxu0 %v1135
    %1180 = vmatprep.subr.mxu0 0.0
    %1181 = vmatpush1.xpose.msra.mxu0 %v1138
    %1182 = vmatprep.subr.mxu0 0.0
    %1183 = vmatpush1.xpose.msra.mxu0 %v1141
    %1184 = vmatprep.subr.mxu0 0.0
    %1185 = vmatpush1.xpose.msra.mxu0 %v1144
    %1186 = vmatprep.subr.mxu0 0.0
    %1187 = vmatpush1.xpose.msra.mxu0 %v1147
    %1188 = vmatprep.subr.mxu0 0.0
    %1189 = vmatpush1.xpose.msra.mxu0 %v1150
    %1190 = vmatprep.subr.mxu0 0.0
    %1191 = vmatpush1.xpose.msra.mxu0 %v1153
    %1192 = vmatprep.subr.mxu0 0.0
    %1193 = vmatpush1.xpose.msra.mxu0 %v1156
    %1194 = vmatprep.subr.mxu0 0.0
    %1195 = vmatpush1.xpose.msra.mxu0 %v1159
    %1196 = vmatprep.subr.mxu0 0.0
    %1197 = vmatpush1.xpose.msra.mxu0 %v1162
    %1198 = vmatprep.subr.mxu0 0.0
    %1199 = vmatpush1.xpose.msra.mxu0 %v1165
    %1200 = vmatprep.subr.mxu0 0.0
    %1201 = vmatpush1.xpose.msra.mxu0 %v1168
    %1202 = vmatprep.subr.mxu0 0.0
    %1203 = vmatpush1.xpose.msra.mxu0 0.0
    %1204 = vmatprep.subr.mxu0 0.0
    %1205 = vmatpush1.xpose.msra.mxu0 0.0
    %1206 = vmatprep.subr.mxu0 0.0
    %1207 = vmatpush1.xpose.msra.mxu0 0.0
    %1208 = vmatprep.subr.mxu0 0.0
    %1209 = vmatpush1.xpose.msra.mxu0 0.0
    %1210 = vmatprep.subr.mxu0 0.0
    %1211 = vmatpush1.xpose.msra.mxu0 0.0
    %1212 = vmatprep.subr.mxu0 0.0
    %1213 = vmatpush1.xpose.msra.mxu0 0.0
    %1214 = vmatprep.subr.mxu0 0.0
    %1215 = vmatpush1.xpose.msra.mxu0 0.0
    %1216 = vmatprep.subr.mxu0 0.0
    %1217 = vmatpush1.xpose.msra.mxu0 0.0
    %1218 = vmatprep.subr.mxu0 0.0
    %1219 = vmatpush1.xpose.msra.mxu0 0.0
    %1220 = vmatprep.subr.mxu0 0.0
    %1221 = vmatpush1.xpose.msra.mxu0 0.0
    %1222 = vmatprep.subr.mxu0 0.0
    %1223 = vmatpush1.xpose.msra.mxu0 0.0
    %1224 = vmatprep.subr.mxu0 0.0
    %1225 = vmatpush1.xpose.msra.mxu0 0.0
    %1226 = vmatprep.subr.mxu0 0.0
    %1227 = vmatpush1.xpose.msra.mxu0 0.0
    %1228 = vmatprep.subr.mxu0 0.0
    %1229 = vmatpush1.xpose.msra.mxu0 0.0
    %1230 = vmatprep.subr.mxu0 0.0
    %1231 = vmatpush1.xpose.msra.mxu0 0.0
    %1232 = vmatprep.subr.mxu0 0.0
    %1233 = vmatpush1.xpose.msra.mxu0 0.0
    %1234 = vmatprep.mubr.f32.mxu0 0.0
    %1235 = vmatmul.mubr.f32.gmra.mrb[0].mxu0 %v1002
    %v1236 = vpop.f32.mrb[0].mxu0
    %v1237 = vadd.f32 0.0, %v1236
    %v1238 = vpop.f32.mrb[0].mxu0
    %1239 = vdwg.mxu0
    %1240 = vmatprep.subr.mxu0 0.0
    %1241 = vmatpush1.xpose.msra.mxu0 %v1005
    %1242 = vmatprep.subr.mxu0 0.0
    %1243 = vmatpush1.xpose.msra.mxu0 %v1008
    %1244 = vmatprep.subr.mxu0 0.0
    %1245 = vmatpush1.xpose.msra.mxu0 %v1011
    %1246 = vmatprep.subr.mxu0 0.0
    %1247 = vmatpush1.xpose.msra.mxu0 %v1014
    %1248 = vmatprep.subr.mxu0 0.0
    %1249 = vmatpush1.xpose.msra.mxu0 %v1017
    %1250 = vmatprep.subr.mxu0 0.0
    %1251 = vmatpush1.xpose.msra.mxu0 %v1020
    %1252 = vmatprep.subr.mxu0 0.0
    %1253 = vmatpush1.xpose.msra.mxu0 %v1023
    %1254 = vmatprep.subr.mxu0 0.0
    %1255 = vmatpush1.xpose.msra.mxu0 %v1026
    %1256 = vmatprep.subr.mxu0 0.0
    %1257 = vmatpush1.xpose.msra.mxu0 %v1029
    %1258 = vmatprep.subr.mxu0 0.0
    %1259 = vmatpush1.xpose.msra.mxu0 %v1032
    %1260 = vmatprep.subr.mxu0 0.0
    %1261 = vmatpush1.xpose.msra.mxu0 %v1035
    %1262 = vmatprep.subr.mxu0 0.0
    %1263 = vmatpush1.xpose.msra.mxu0 %v1038
    %1264 = vmatprep.subr.mxu0 0.0
    %1265 = vmatpush1.xpose.msra.mxu0 %v1041
    %1266 = vmatprep.subr.mxu0 0.0
    %1267 = vmatpush1.xpose.msra.mxu0 %v1044
    %1268 = vmatprep.subr.mxu0 0.0
    %1269 = vmatpush1.xpose.msra.mxu0 %v1047
    %1270 = vmatprep.subr.mxu0 0.0
    %1271 = vmatpush1.xpose.msra.mxu0 %v1050
    %1272 = vmatprep.subr.mxu0 0.0
    %1273 = vmatpush1.xpose.msra.mxu0 0.0
    %1274 = vmatprep.subr.mxu0 0.0
    %1275 = vmatpush1.xpose.msra.mxu0 0.0
    %1276 = vmatprep.subr.mxu0 0.0
    %1277 = vmatpush1.xpose.msra.mxu0 0.0
    %1278 = vmatprep.subr.mxu0 0.0
    %1279 = vmatpush1.xpose.msra.mxu0 0.0
    %1280 = vmatprep.subr.mxu0 0.0
    %1281 = vmatpush1.xpose.msra.mxu0 0.0
    %1282 = vmatprep.subr.mxu0 0.0
    %1283 = vmatpush1.xpose.msra.mxu0 0.0
    %1284 = vmatprep.subr.mxu0 0.0
    %1285 = vmatpush1.xpose.msra.mxu0 0.0
    %1286 = vmatprep.subr.mxu0 0.0
    %1287 = vmatpush1.xpose.msra.mxu0 0.0
    %1288 = vmatprep.subr.mxu0 0.0
    %1289 = vmatpush1.xpose.msra.mxu0 0.0
    %1290 = vmatprep.subr.mxu0 0.0
    %1291 = vmatpush1.xpose.msra.mxu0 0.0
    %1292 = vmatprep.subr.mxu0 0.0
    %1293 = vmatpush1.xpose.msra.mxu0 0.0
    %1294 = vmatprep.subr.mxu0 0.0
    %1295 = vmatpush1.xpose.msra.mxu0 0.0
    %1296 = vmatprep.subr.mxu0 0.0
    %1297 = vmatpush1.xpose.msra.mxu0 0.0
    %1298 = vmatprep.subr.mxu0 0.0
    %1299 = vmatpush1.xpose.msra.mxu0 0.0
    %1300 = vmatprep.subr.mxu0 0.0
    %1301 = vmatpush1.xpose.msra.mxu0 0.0
    %1302 = vmatprep.subr.mxu0 0.0
    %1303 = vmatpush1.xpose.msra.mxu0 0.0
    %1304 = vmatprep.mubr.f32.mxu0 0.0
    %1305 = vmatmul.mubr.f32.gmra.mrb[0].mxu0 %v1005
    %v1306 = vpop.f32.mrb[0].mxu0
    %v1307 = vadd.f32 0.0, %v1306
    %v1308 = vpop.f32.mrb[0].mxu0
    %1309 = vmatprep.mubr.f32.mxu0 0.0
    %1310 = vmatmul.mubr.f32.gmra.mrb[0].mxu0 %v1008
    %v1311 = vpop.f32.mrb[0].mxu0
    %v1312 = vadd.f32 0.0, %v1311
    %v1313 = vpop.f32.mrb[0].mxu0
    %1314 = vmatprep.mubr.f32.mxu0 0.0
    %1315 = vmatmul.mubr.f32.gmra.mrb[0].mxu0 %v1011
    %v1316 = vpop.f32.mrb[0].mxu0
    %v1317 = vadd.f32 0.0, %v1316
    %v1318 = vpop.f32.mrb[0].mxu0
    %1319 = vmatprep.mubr.f32.mxu0 0.0
    %1320 = vmatmul.mubr.f32.gmra.mrb[0].mxu0 %v1014
    %v1321 = vpop.f32.mrb[0].mxu0
    %v1322 = vadd.f32 0.0, %v1321
    %v1323 = vpop.f32.mrb[0].mxu0
    %1324 = vmatprep.mubr.f32.mxu0 0.0
    %1325 = vmatmul.mubr.f32.gmra.mrb[0].mxu0 %v1017
    %v1326 = vpop.f32.mrb[0].mxu0
    %v1327 = vadd.f32 0.0, %v1326
    %v1328 = vpop.f32.mrb[0].mxu0
    %1329 = vmatprep.mubr.f32.mxu0 0.0
    %1330 = vmatmul.mubr.f32.gmra.mrb[0].mxu0 %v1020
    %v1331 = vpop.f32.mrb[0].mxu0
    %v1332 = vadd.f32 0.0, %v1331
    %v1333 = vpop.f32.mrb[0].mxu0
    %1334 = vmatprep.mubr.f32.mxu0 0.0
    %1335 = vmatmul.mubr.f32.gmra.mrb[0].mxu0 %v1023
    %v1336 = vpop.f32.mrb[0].mxu0
    %v1337 = vadd.f32 0.0, %v1336
    %v1338 = vpop.f32.mrb[0].mxu0
    %1339 = vmatprep.mubr.f32.mxu0 0.0
    %1340 = vmatmul.mubr.f32.gmra.mrb[0].mxu0 %v1026
    %v1341 = vpop.f32.mrb[0].mxu0
    %v1342 = vadd.f32 0.0, %v1341
    %v1343 = vpop.f32.mrb[0].mxu0
    %1344 = vmatprep.mubr.f32.mxu0 0.0
    %1345 = vmatmul.mubr.f32.gmra.mrb[0].mxu0 %v1029
    %v1346 = vpop.f32.mrb[0].mxu0
    %v1347 = vadd.f32 0.0, %v1346
    %v1348 = vpop.f32.mrb[0].mxu0
    %1349 = vmatprep.mubr.f32.mxu0 0.0
    %1350 = vmatmul.mubr.f32.gmra.mrb[0].mxu0 %v1032
    %v1351 = vpop.f32.mrb[0].mxu0
    %v1352 = vadd.f32 0.0, %v1351
    %v1353 = vpop.f32.mrb[0].mxu0
    %1354 = vmatprep.mubr.f32.mxu0 0.0
    %1355 = vmatmul.mubr.f32.gmra.mrb[0].mxu0 %v1035
    %v1356 = vpop.f32.mrb[0].mxu0
    %v1357 = vadd.f32 0.0, %v1356
    %v1358 = vpop.f32.mrb[0].mxu0
    %1359 = vmatprep.mubr.f32.mxu0 0.0
    %1360 = vmatmul.mubr.f32.gmra.mrb[0].mxu0 %v1038
    %v1361 = vpop.f32.mrb[0].mxu0
    %v1362 = vadd.f32 0.0, %v1361
    %v1363 = vpop.f32.mrb[0].mxu0
    %1364 = vmatprep.mubr.f32.mxu0 0.0
    %1365 = vmatmul.mubr.f32.gmra.mrb[0].mxu0 %v1041
    %v1366 = vpop.f32.mrb[0].mxu0
    %v1367 = vadd.f32 0.0, %v1366
    %v1368 = vpop.f32.mrb[0].mxu0
    %1369 = vmatprep.mubr.f32.mxu0 0.0
    %1370 = vmatmul.mubr.f32.gmra.mrb[0].mxu0 %v1044
    %v1371 = vpop.f32.mrb[0].mxu0
    %v1372 = vadd.f32 0.0, %v1371
    %v1373 = vpop.f32.mrb[0].mxu0
    %1374 = vmatprep.mubr.f32.mxu0 0.0
    %1375 = vmatmul.mubr.f32.gmra.mrb[0].mxu0 %v1047
    %v1376 = vpop.f32.mrb[0].mxu0
    %v1377 = vadd.f32 0.0, %v1376
    %v1378 = vpop.f32.mrb[0].mxu0
    %1379 = vmatprep.mubr.f32.mxu0 0.0
    %1380 = vmatmul.mubr.f32.gmra.mrb[0].mxu0 %v1050
    %v1381 = vpop.f32.mrb[0].mxu0
    %v1382 = vadd.f32 0.0, %v1381
    %v1383 = vpop.f32.mrb[0].mxu0
    %1384 = vdwg.mxu0
    %1385 = vmatprep.subr.mxu0 0.0
    %1386 = vmatpush1.xpose.msra.mxu0 %v1123
    %1387 = vmatprep.subr.mxu0 0.0
    %1388 = vmatpush1.xpose.msra.mxu0 %v1126
    %1389 = vmatprep.subr.mxu0 0.0
    %1390 = vmatpush1.xpose.msra.mxu0 %v1129
    %1391 = vmatprep.subr.mxu0 0.0
    %1392 = vmatpush1.xpose.msra.mxu0 %v1132
    %1393 = vmatprep.subr.mxu0 0.0
    %1394 = vmatpush1.xpose.msra.mxu0 %v1135
    %1395 = vmatprep.subr.mxu0 0.0
    %1396 = vmatpush1.xpose.msra.mxu0 %v1138
    %1397 = vmatprep.subr.mxu0 0.0
    %1398 = vmatpush1.xpose.msra.mxu0 %v1141
    %1399 = vmatprep.subr.mxu0 0.0
    %1400 = vmatpush1.xpose.msra.mxu0 %v1144
    %1401 = vmatprep.subr.mxu0 0.0
    %1402 = vmatpush1.xpose.msra.mxu0 %v1147
    %1403 = vmatprep.subr.mxu0 0.0
    %1404 = vmatpush1.xpose.msra.mxu0 %v1150
    %1405 = vmatprep.subr.mxu0 0.0
    %1406 = vmatpush1.xpose.msra.mxu0 %v1153
    %1407 = vmatprep.subr.mxu0 0.0
    %1408 = vmatpush1.xpose.msra.mxu0 %v1156
    %1409 = vmatprep.subr.mxu0 0.0
    %1410 = vmatpush1.xpose.msra.mxu0 %v1159
    %1411 = vmatprep.subr.mxu0 0.0
    %1412 = vmatpush1.xpose.msra.mxu0 %v1162
    %1413 = vmatprep.subr.mxu0 0.0
    %1414 = vmatpush1.xpose.msra.mxu0 %v1165
    %1415 = vmatprep.subr.mxu0 0.0
    %1416 = vmatpush1.xpose.msra.mxu0 %v1168
    %1417 = vmatprep.subr.mxu0 0.0
    %1418 = vmatpush1.xpose.msra.mxu0 0.0
    %1419 = vmatprep.subr.mxu0 0.0
    %1420 = vmatpush1.xpose.msra.mxu0 0.0
    %1421 = vmatprep.subr.mxu0 0.0
    %1422 = vmatpush1.xpose.msra.mxu0 0.0
    %1423 = vmatprep.subr.mxu0 0.0
    %1424 = vmatpush1.xpose.msra.mxu0 0.0
    %1425 = vmatprep.subr.mxu0 0.0
    %1426 = vmatpush1.xpose.msra.mxu0 0.0
    %1427 = vmatprep.subr.mxu0 0.0
    %1428 = vmatpush1.xpose.msra.mxu0 0.0
    %1429 = vmatprep.subr.mxu0 0.0
    %1430 = vmatpush1.xpose.msra.mxu0 0.0
    %1431 = vmatprep.subr.mxu0 0.0
    %1432 = vmatpush1.xpose.msra.mxu0 0.0
    %1433 = vmatprep.subr.mxu0 0.0
    %1434 = vmatpush1.xpose.msra.mxu0 0.0
    %1435 = vmatprep.subr.mxu0 0.0
    %1436 = vmatpush1.xpose.msra.mxu0 0.0
    %1437 = vmatprep.subr.mxu0 0.0
    %1438 = vmatpush1.xpose.msra.mxu0 0.0
    %1439 = vmatprep.subr.mxu0 0.0
    %1440 = vmatpush1.xpose.msra.mxu0 0.0
    %1441 = vmatprep.subr.mxu0 0.0
    %1442 = vmatpush1.xpose.msra.mxu0 0.0
    %1443 = vmatprep.subr.mxu0 0.0
    %1444 = vmatpush1.xpose.msra.mxu0 0.0
    %1445 = vmatprep.subr.mxu0 0.0
    %1446 = vmatpush1.xpose.msra.mxu0 0.0
    %1447 = vmatprep.subr.mxu0 0.0
    %1448 = vmatpush1.xpose.msra.mxu0 0.0
    %1449 = vmatprep.mubr.f32.mxu0 0.0
    %1450 = vmatmul.mubr.f32.gmra.mrb[0].mxu0 %v1123
    %v1451 = vpop.f32.mrb[0].mxu0
    %v1452 = vadd.f32 0.0, %v1451
    %v1453 = vpop.f32.mrb[0].mxu0
    %1454 = vmatprep.mubr.f32.mxu0 0.0
    %1455 = vmatmul.mubr.f32.gmra.mrb[0].mxu0 %v1126
    %v1456 = vpop.f32.mrb[0].mxu0
    %v1457 = vadd.f32 0.0, %v1456
    %v1458 = vpop.f32.mrb[0].mxu0
    %1459 = vmatprep.mubr.f32.mxu0 0.0
    %1460 = vmatmul.mubr.f32.gmra.mrb[0].mxu0 %v1129
    %v1461 = vpop.f32.mrb[0].mxu0
    %v1462 = vadd.f32 0.0, %v1461
    %v1463 = vpop.f32.mrb[0].mxu0
    %1464 = vmatprep.mubr.f32.mxu0 0.0
    %1465 = vmatmul.mubr.f32.gmra.mrb[0].mxu0 %v1132
    %v1466 = vpop.f32.mrb[0].mxu0
    %v1467 = vadd.f32 0.0, %v1466
    %v1468 = vpop.f32.mrb[0].mxu0
    %1469 = vmatprep.mubr.f32.mxu0 0.0
    %1470 = vmatmul.mubr.f32.gmra.mrb[0].mxu0 %v1135
    %v1471 = vpop.f32.mrb[0].mxu0
    %v1472 = vadd.f32 0.0, %v1471
    %v1473 = vpop.f32.mrb[0].mxu0
    %1474 = vmatprep.mubr.f32.mxu0 0.0
    %1475 = vmatmul.mubr.f32.gmra.mrb[0].mxu0 %v1138
    %v1476 = vpop.f32.mrb[0].mxu0
    %v1477 = vadd.f32 0.0, %v1476
    %v1478 = vpop.f32.mrb[0].mxu0
    %1479 = vmatprep.mubr.f32.mxu0 0.0
    %1480 = vmatmul.mubr.f32.gmra.mrb[0].mxu0 %v1141
    %v1481 = vpop.f32.mrb[0].mxu0
    %v1482 = vadd.f32 0.0, %v1481
    %v1483 = vpop.f32.mrb[0].mxu0
    %1484 = vmatprep.mubr.f32.mxu0 0.0
    %1485 = vmatmul.mubr.f32.gmra.mrb[0].mxu0 %v1144
    %v1486 = vpop.f32.mrb[0].mxu0
    %v1487 = vadd.f32 0.0, %v1486
    %v1488 = vpop.f32.mrb[0].mxu0
    %1489 = vmatprep.mubr.f32.mxu0 0.0
    %1490 = vmatmul.mubr.f32.gmra.mrb[0].mxu0 %v1147
    %v1491 = vpop.f32.mrb[0].mxu0
    %v1492 = vadd.f32 0.0, %v1491
    %v1493 = vpop.f32.mrb[0].mxu0
    %1494 = vmatprep.mubr.f32.mxu0 0.0
    %1495 = vmatmul.mubr.f32.gmra.mrb[0].mxu0 %v1150
    %v1496 = vpop.f32.mrb[0].mxu0
    %v1497 = vadd.f32 0.0, %v1496
    %v1498 = vpop.f32.mrb[0].mxu0
    %1499 = vmatprep.mubr.f32.mxu0 0.0
    %1500 = vmatmul.mubr.f32.gmra.mrb[0].mxu0 %v1153
    %v1501 = vpop.f32.mrb[0].mxu0
    %v1502 = vadd.f32 0.0, %v1501
    %v1503 = vpop.f32.mrb[0].mxu0
    %1504 = vmatprep.mubr.f32.mxu0 0.0
    %1505 = vmatmul.mubr.f32.gmra.mrb[0].mxu0 %v1156
    %v1506 = vpop.f32.mrb[0].mxu0
    %v1507 = vadd.f32 0.0, %v1506
    %v1508 = vpop.f32.mrb[0].mxu0
    %1509 = vmatprep.mubr.f32.mxu0 0.0
    %1510 = vmatmul.mubr.f32.gmra.mrb[0].mxu0 %v1159
    %v1511 = vpop.f32.mrb[0].mxu0
    %v1512 = vadd.f32 0.0, %v1511
    %v1513 = vpop.f32.mrb[0].mxu0
    %1514 = vmatprep.mubr.f32.mxu0 0.0
    %1515 = vmatmul.mubr.f32.gmra.mrb[0].mxu0 %v1162
    %v1516 = vpop.f32.mrb[0].mxu0
    %v1517 = vadd.f32 0.0, %v1516
    %v1518 = vpop.f32.mrb[0].mxu0
    %1519 = vmatprep.mubr.f32.mxu0 0.0
    %1520 = vmatmul.mubr.f32.gmra.mrb[0].mxu0 %v1165
    %v1521 = vpop.f32.mrb[0].mxu0
    %v1522 = vadd.f32 0.0, %v1521
    %v1523 = vpop.f32.mrb[0].mxu0
    %1524 = vmatprep.mubr.f32.mxu0 0.0
    %1525 = vmatmul.mubr.f32.gmra.mrb[0].mxu0 %v1168
    %v1526 = vpop.f32.mrb[0].mxu0
    %v1527 = vadd.f32 0.0, %v1526
    %v1528 = vpop.f32.mrb[0].mxu0
    %1529 = vdwg.mxu0
    %1530 = vmatprep.subr.mxu0 0.0
    %1531 = vmatpush1.msra.mxu0 %v1307
    %1532 = vmatprep.subr.mxu0 0.0
    %1533 = vmatpush1.msra.mxu0 %v1312
    %1534 = vmatprep.subr.mxu0 0.0
    %1535 = vmatpush1.msra.mxu0 %v1317
    %1536 = vmatprep.subr.mxu0 0.0
    %1537 = vmatpush1.msra.mxu0 %v1322
    %1538 = vmatprep.subr.mxu0 0.0
    %1539 = vmatpush1.msra.mxu0 %v1327
    %1540 = vmatprep.subr.mxu0 0.0
    %1541 = vmatpush1.msra.mxu0 %v1332
    %1542 = vmatprep.subr.mxu0 0.0
    %1543 = vmatpush1.msra.mxu0 %v1337
    %1544 = vmatprep.subr.mxu0 0.0
    %1545 = vmatpush1.msra.mxu0 %v1342
    %1546 = vmatprep.subr.mxu0 0.0
    %1547 = vmatpush1.msra.mxu0 %v1347
    %1548 = vmatprep.subr.mxu0 0.0
    %1549 = vmatpush1.msra.mxu0 %v1352
    %1550 = vmatprep.subr.mxu0 0.0
    %1551 = vmatpush1.msra.mxu0 %v1357
    %1552 = vmatprep.subr.mxu0 0.0
    %1553 = vmatpush1.msra.mxu0 %v1362
    %1554 = vmatprep.subr.mxu0 0.0
    %1555 = vmatpush1.msra.mxu0 %v1367
    %1556 = vmatprep.subr.mxu0 0.0
    %1557 = vmatpush1.msra.mxu0 %v1372
    %1558 = vmatprep.subr.mxu0 0.0
    %1559 = vmatpush1.msra.mxu0 %v1377
    %1560 = vmatprep.subr.mxu0 0.0
    %1561 = vmatpush1.msra.mxu0 %v1382
    %1562 = vmatprep.subr.mxu0 0.0
    %1563 = vmatpush1.msra.mxu0 0.0
    %1564 = vmatprep.subr.mxu0 0.0
    %1565 = vmatpush1.msra.mxu0 0.0
    %1566 = vmatprep.subr.mxu0 0.0
    %1567 = vmatpush1.msra.mxu0 0.0
    %1568 = vmatprep.subr.mxu0 0.0
    %1569 = vmatpush1.msra.mxu0 0.0
    %1570 = vmatprep.subr.mxu0 0.0
    %1571 = vmatpush1.msra.mxu0 0.0
    %1572 = vmatprep.subr.mxu0 0.0
    %1573 = vmatpush1.msra.mxu0 0.0
    %1574 = vmatprep.subr.mxu0 0.0
    %1575 = vmatpush1.msra.mxu0 0.0
    %1576 = vmatprep.subr.mxu0 0.0
    %1577 = vmatpush1.msra.mxu0 0.0
    %1578 = vmatprep.subr.mxu0 0.0
    %1579 = vmatpush1.msra.mxu0 0.0
    %1580 = vmatprep.subr.mxu0 0.0
    %1581 = vmatpush1.msra.mxu0 0.0
    %1582 = vmatprep.subr.mxu0 0.0
    %1583 = vmatpush1.msra.mxu0 0.0
    %1584 = vmatprep.subr.mxu0 0.0
    %1585 = vmatpush1.msra.mxu0 0.0
    %1586 = vmatprep.subr.mxu0 0.0
    %1587 = vmatpush1.msra.mxu0 0.0
    %1588 = vmatprep.subr.mxu0 0.0
    %1589 = vmatpush1.msra.mxu0 0.0
    %1590 = vmatprep.subr.mxu0 0.0
    %1591 = vmatpush1.msra.mxu0 0.0
    %1592 = vmatprep.subr.mxu0 0.0
    %1593 = vmatpush1.msra.mxu0 0.0
    %1594 = vmatprep.mubr.f32.mxu0 0.0
    %1595 = vmatmul.mubr.f32.gmra.mrb[0].mxu0 %v1119
    %v1596 = vpop.f32.mrb[0].mxu0
    %v1597 = vadd.f32 0.0, %v1596
    %v1598 = vpop.f32.mrb[0].mxu0
    %1599 = vdwg.mxu0
    %1600 = vmatprep.subr.mxu0 0.0
    %1601 = vmatpush1.msra.mxu0 %v1452
    %1602 = vmatprep.subr.mxu0 0.0
    %1603 = vmatpush1.msra.mxu0 %v1457
    %1604 = vmatprep.subr.mxu0 0.0
    %1605 = vmatpush1.msra.mxu0 %v1462
    %1606 = vmatprep.subr.mxu0 0.0
    %1607 = vmatpush1.msra.mxu0 %v1467
    %1608 = vmatprep.subr.mxu0 0.0
    %1609 = vmatpush1.msra.mxu0 %v1472
    %1610 = vmatprep.subr.mxu0 0.0
    %1611 = vmatpush1.msra.mxu0 %v1477
    %1612 = vmatprep.subr.mxu0 0.0
    %1613 = vmatpush1.msra.mxu0 %v1482
    %1614 = vmatprep.subr.mxu0 0.0
    %1615 = vmatpush1.msra.mxu0 %v1487
    %1616 = vmatprep.subr.mxu0 0.0
    %1617 = vmatpush1.msra.mxu0 %v1492
    %1618 = vmatprep.subr.mxu0 0.0
    %1619 = vmatpush1.msra.mxu0 %v1497
    %1620 = vmatprep.subr.mxu0 0.0
    %1621 = vmatpush1.msra.mxu0 %v1502
    %1622 = vmatprep.subr.mxu0 0.0
    %1623 = vmatpush1.msra.mxu0 %v1507
    %1624 = vmatprep.subr.mxu0 0.0
    %1625 = vmatpush1.msra.mxu0 %v1512
    %1626 = vmatprep.subr.mxu0 0.0
    %1627 = vmatpush1.msra.mxu0 %v1517
    %1628 = vmatprep.subr.mxu0 0.0
    %1629 = vmatpush1.msra.mxu0 %v1522
    %1630 = vmatprep.subr.mxu0 0.0
    %1631 = vmatpush1.msra.mxu0 %v1527
    %1632 = vmatprep.subr.mxu0 0.0
    %1633 = vmatpush1.msra.mxu0 0.0
    %1634 = vmatprep.subr.mxu0 0.0
    %1635 = vmatpush1.msra.mxu0 0.0
    %1636 = vmatprep.subr.mxu0 0.0
    %1637 = vmatpush1.msra.mxu0 0.0
    %1638 = vmatprep.subr.mxu0 0.0
    %1639 = vmatpush1.msra.mxu0 0.0
    %1640 = vmatprep.subr.mxu0 0.0
    %1641 = vmatpush1.msra.mxu0 0.0
    %1642 = vmatprep.subr.mxu0 0.0
    %1643 = vmatpush1.msra.mxu0 0.0
    %1644 = vmatprep.subr.mxu0 0.0
    %1645 = vmatpush1.msra.mxu0 0.0
    %1646 = vmatprep.subr.mxu0 0.0
    %1647 = vmatpush1.msra.mxu0 0.0
    %1648 = vmatprep.subr.mxu0 0.0
    %1649 = vmatpush1.msra.mxu0 0.0
    %1650 = vmatprep.subr.mxu0 0.0
    %1651 = vmatpush1.msra.mxu0 0.0
    %1652 = vmatprep.subr.mxu0 0.0
    %1653 = vmatpush1.msra.mxu0 0.0
    %1654 = vmatprep.subr.mxu0 0.0
    %1655 = vmatpush1.msra.mxu0 0.0
    %1656 = vmatprep.subr.mxu0 0.0
    %1657 = vmatpush1.msra.mxu0 0.0
    %1658 = vmatprep.subr.mxu0 0.0
    %1659 = vmatpush1.msra.mxu0 0.0
    %1660 = vmatprep.subr.mxu0 0.0
    %1661 = vmatpush1.msra.mxu0 0.0
    %1662 = vmatprep.subr.mxu0 0.0
    %1663 = vmatpush1.msra.mxu0 0.0
    %1664 = vmatprep.mubr.f32.mxu0 0.0
    %1665 = vmatmul.mubr.f32.gmra.mrb[0].mxu0 %v1237
    %v1666 = vpop.f32.mrb[0].mxu0
    %v1667 = vadd.f32 0.0, %v1666
    %v1668 = vpop.f32.mrb[0].mxu0
    %1669 = vdwg.mxu0
    %v1670 = vlaneseq
    %v1671 = vand.u32 %v1670, 127
    %vm1672 = vcmp.lt.s32.totalorder %v1671, 16
    %v1673 = vsel %vm1672, %v1597, -1e+30
    %v1674 = vsel %vm1672, %v1667, -1e+30
    %1675 = vmax.xlane.f32.xlu0 %v1673
    %v1676 = vpop.xlane.xlu0 %1675
    %1677 = vmax.xlane.f32.xlu0 %v1674
    %v1678 = vpop.xlane.xlu0 %1677
    %v1679 = vsub.f32 %v1673, %v1676
    %v1680 = vsub.f32 %v1674, %v1678
    %v1681 = vmul.f32 %v1679, 1.442695
    %v1682 = vpow.pop %v1681
    %v1683 = vmul.f32 %v1680, 1.442695
    %v1684 = vpow.pop %v1683
    %1685 = vadd.xlane.f32.xlu0 %v1682
    %v1686 = vpop.xlane.xlu0 %1685
    %1687 = vadd.xlane.f32.xlu0 %v1684
    %v1688 = vpop.xlane.xlu0 %1687
    %v1689 = vrcp.pop %v1686
    %v1690 = vrcp.pop %v1688
    %v1691 = vmul.f32 %v1682, %v1689
    %v1692 = vmul.f32 %v1684, %v1690
    %1693 = vmatprep.subr.mxu0 0.0
    %1694 = vmatpush1.msra.mxu0 %v24
    %1695 = vmatprep.subr.mxu0 0.0
    %1696 = vmatpush1.msra.mxu0 %v25
    %1697 = vmatprep.subr.mxu0 0.0
    %1698 = vmatpush1.msra.mxu0 %v26
    %1699 = vmatprep.subr.mxu0 0.0
    %1700 = vmatpush1.msra.mxu0 %v27
    %1701 = vmatprep.subr.mxu0 0.0
    %1702 = vmatpush1.msra.mxu0 %v28
    %1703 = vmatprep.subr.mxu0 0.0
    %1704 = vmatpush1.msra.mxu0 %v29
    %1705 = vmatprep.subr.mxu0 0.0
    %1706 = vmatpush1.msra.mxu0 %v30
    %1707 = vmatprep.subr.mxu0 0.0
    %1708 = vmatpush1.msra.mxu0 %v31
    %1709 = vmatprep.subr.mxu0 0.0
    %1710 = vmatpush1.msra.mxu0 %v32
    %1711 = vmatprep.subr.mxu0 0.0
    %1712 = vmatpush1.msra.mxu0 %v33
    %1713 = vmatprep.subr.mxu0 0.0
    %1714 = vmatpush1.msra.mxu0 %v34
    %1715 = vmatprep.subr.mxu0 0.0
    %1716 = vmatpush1.msra.mxu0 %v35
    %1717 = vmatprep.subr.mxu0 0.0
    %1718 = vmatpush1.msra.mxu0 %v36
    %1719 = vmatprep.subr.mxu0 0.0
    %1720 = vmatpush1.msra.mxu0 %v37
    %1721 = vmatprep.subr.mxu0 0.0
    %1722 = vmatpush1.msra.mxu0 %v38
    %1723 = vmatprep.subr.mxu0 0.0
    %1724 = vmatpush1.msra.mxu0 %v39
    %1725 = vmatprep.subr.mxu0 0.0
    %1726 = vmatpush1.msra.mxu0 0.0
    %1727 = vmatprep.subr.mxu0 0.0
    %1728 = vmatpush1.msra.mxu0 0.0
    %1729 = vmatprep.subr.mxu0 0.0
    %1730 = vmatpush1.msra.mxu0 0.0
    %1731 = vmatprep.subr.mxu0 0.0
    %1732 = vmatpush1.msra.mxu0 0.0
    %1733 = vmatprep.subr.mxu0 0.0
    %1734 = vmatpush1.msra.mxu0 0.0
    %1735 = vmatprep.subr.mxu0 0.0
    %1736 = vmatpush1.msra.mxu0 0.0
    %1737 = vmatprep.subr.mxu0 0.0
    %1738 = vmatpush1.msra.mxu0 0.0
    %1739 = vmatprep.subr.mxu0 0.0
    %1740 = vmatpush1.msra.mxu0 0.0
    %1741 = vmatprep.subr.mxu0 0.0
    %1742 = vmatpush1.msra.mxu0 0.0
    %1743 = vmatprep.subr.mxu0 0.0
    %1744 = vmatpush1.msra.mxu0 0.0
    %1745 = vmatprep.subr.mxu0 0.0
    %1746 = vmatpush1.msra.mxu0 0.0
    %1747 = vmatprep.subr.mxu0 0.0
    %1748 = vmatpush1.msra.mxu0 0.0
    %1749 = vmatprep.subr.mxu0 0.0
    %1750 = vmatpush1.msra.mxu0 0.0
    %1751 = vmatprep.subr.mxu0 0.0
    %1752 = vmatpush1.msra.mxu0 0.0
    %1753 = vmatprep.subr.mxu0 0.0
    %1754 = vmatpush1.msra.mxu0 0.0
    %1755 = vmatprep.subr.mxu0 0.0
    %1756 = vmatpush1.msra.mxu0 0.0
    %1757 = vmatprep.mubr.f32.mxu0 0.0
    %1758 = vmatmul.mubr.f32.gmra.mrb[0].mxu0 %v1691
    %v1759 = vpop.f32.mrb[0].mxu0
    %v1760 = vadd.f32 0.0, %v1759
    %v1761 = vpop.f32.mrb[0].mxu0
    %1762 = vdwg.mxu0
    %1763 = vmatprep.subr.mxu0 0.0
    %1764 = vmatpush1.msra.mxu0 %v40
    %1765 = vmatprep.subr.mxu0 0.0
    %1766 = vmatpush1.msra.mxu0 %v41
    %1767 = vmatprep.subr.mxu0 0.0
    %1768 = vmatpush1.msra.mxu0 %v42
    %1769 = vmatprep.subr.mxu0 0.0
    %1770 = vmatpush1.msra.mxu0 %v43
    %1771 = vmatprep.subr.mxu0 0.0
    %1772 = vmatpush1.msra.mxu0 %v44
    %1773 = vmatprep.subr.mxu0 0.0
    %1774 = vmatpush1.msra.mxu0 %v45
    %1775 = vmatprep.subr.mxu0 0.0
    %1776 = vmatpush1.msra.mxu0 %v46
    %1777 = vmatprep.subr.mxu0 0.0
    %1778 = vmatpush1.msra.mxu0 %v47
    %1779 = vmatprep.subr.mxu0 0.0
    %1780 = vmatpush1.msra.mxu0 %v48
    %1781 = vmatprep.subr.mxu0 0.0
    %1782 = vmatpush1.msra.mxu0 %v49
    %1783 = vmatprep.subr.mxu0 0.0
    %1784 = vmatpush1.msra.mxu0 %v50
    %1785 = vmatprep.subr.mxu0 0.0
    %1786 = vmatpush1.msra.mxu0 %v51
    %1787 = vmatprep.subr.mxu0 0.0
    %1788 = vmatpush1.msra.mxu0 %v52
    %1789 = vmatprep.subr.mxu0 0.0
    %1790 = vmatpush1.msra.mxu0 %v53
    %1791 = vmatprep.subr.mxu0 0.0
    %1792 = vmatpush1.msra.mxu0 %v54
    %1793 = vmatprep.subr.mxu0 0.0
    %1794 = vmatpush1.msra.mxu0 %v55
    %1795 = vmatprep.subr.mxu0 0.0
    %1796 = vmatpush1.msra.mxu0 0.0
    %1797 = vmatprep.subr.mxu0 0.0
    %1798 = vmatpush1.msra.mxu0 0.0
    %1799 = vmatprep.subr.mxu0 0.0
    %1800 = vmatpush1.msra.mxu0 0.0
    %1801 = vmatprep.subr.mxu0 0.0
    %1802 = vmatpush1.msra.mxu0 0.0
    %1803 = vmatprep.subr.mxu0 0.0
    %1804 = vmatpush1.msra.mxu0 0.0
    %1805 = vmatprep.subr.mxu0 0.0
    %1806 = vmatpush1.msra.mxu0 0.0
    %1807 = vmatprep.subr.mxu0 0.0
    %1808 = vmatpush1.msra.mxu0 0.0
    %1809 = vmatprep.subr.mxu0 0.0
    %1810 = vmatpush1.msra.mxu0 0.0
    %1811 = vmatprep.subr.mxu0 0.0
    %1812 = vmatpush1.msra.mxu0 0.0
    %1813 = vmatprep.subr.mxu0 0.0
    %1814 = vmatpush1.msra.mxu0 0.0
    %1815 = vmatprep.subr.mxu0 0.0
    %1816 = vmatpush1.msra.mxu0 0.0
    %1817 = vmatprep.subr.mxu0 0.0
    %1818 = vmatpush1.msra.mxu0 0.0
    %1819 = vmatprep.subr.mxu0 0.0
    %1820 = vmatpush1.msra.mxu0 0.0
    %1821 = vmatprep.subr.mxu0 0.0
    %1822 = vmatpush1.msra.mxu0 0.0
    %1823 = vmatprep.subr.mxu0 0.0
    %1824 = vmatpush1.msra.mxu0 0.0
    %1825 = vmatprep.subr.mxu0 0.0
    %1826 = vmatpush1.msra.mxu0 0.0
    %1827 = vmatprep.mubr.f32.mxu0 0.0
    %1828 = vmatmul.mubr.f32.gmra.mrb[0].mxu0 %v1692
    %v1829 = vpop.f32.mrb[0].mxu0
    %v1830 = vadd.f32 0.0, %v1829
    %v1831 = vpop.f32.mrb[0].mxu0
    %1832 = vdwg.mxu0
    %v1834 = vsel %vm66, %v1760, 0
    %1836 = vmatprep.subr.mxu0 0.0
    %1837 = vmatpush1.xpose.msra.mxu0 %v1834
    %1838 = vmatprep.subr.mxu0 0.0
    %1839 = vmatpush1.xpose.msra.mxu0 0.0
    %1840 = vmatprep.subr.mxu0 0.0
    %1841 = vmatpush1.xpose.msra.mxu0 0.0
    %1842 = vmatprep.subr.mxu0 0.0
    %1843 = vmatpush1.xpose.msra.mxu0 0.0
    %1844 = vmatprep.subr.mxu0 0.0
    %1845 = vmatpush1.xpose.msra.mxu0 0.0
    %1846 = vmatprep.subr.mxu0 0.0
    %1847 = vmatpush1.xpose.msra.mxu0 0.0
    %1848 = vmatprep.subr.mxu0 0.0
    %1849 = vmatpush1.xpose.msra.mxu0 0.0
    %1850 = vmatprep.subr.mxu0 0.0
    %1851 = vmatpush1.xpose.msra.mxu0 0.0
    %1852 = vmatprep.subr.mxu0 0.0
    %1853 = vmatpush1.xpose.msra.mxu0 0.0
    %1854 = vmatprep.subr.mxu0 0.0
    %1855 = vmatpush1.xpose.msra.mxu0 0.0
    %1856 = vmatprep.subr.mxu0 0.0
    %1857 = vmatpush1.xpose.msra.mxu0 0.0
    %1858 = vmatprep.subr.mxu0 0.0
    %1859 = vmatpush1.xpose.msra.mxu0 0.0
    %1860 = vmatprep.subr.mxu0 0.0
    %1861 = vmatpush1.xpose.msra.mxu0 0.0
    %1862 = vmatprep.subr.mxu0 0.0
    %1863 = vmatpush1.xpose.msra.mxu0 0.0
    %1864 = vmatprep.subr.mxu0 0.0
    %1865 = vmatpush1.xpose.msra.mxu0 0.0
    %1866 = vmatprep.subr.mxu0 0.0
    %1867 = vmatpush1.xpose.msra.mxu0 0.0
    %1868 = vmatprep.subr.mxu0 0.0
    %1869 = vmatpush1.xpose.msra.mxu0 0.0
    %1870 = vmatprep.subr.mxu0 0.0
    %1871 = vmatpush1.xpose.msra.mxu0 0.0
    %1872 = vmatprep.subr.mxu0 0.0
    %1873 = vmatpush1.xpose.msra.mxu0 0.0
    %1874 = vmatprep.subr.mxu0 0.0
    %1875 = vmatpush1.xpose.msra.mxu0 0.0
    %1876 = vmatprep.subr.mxu0 0.0
    %1877 = vmatpush1.xpose.msra.mxu0 0.0
    %1878 = vmatprep.subr.mxu0 0.0
    %1879 = vmatpush1.xpose.msra.mxu0 0.0
    %1880 = vmatprep.subr.mxu0 0.0
    %1881 = vmatpush1.xpose.msra.mxu0 0.0
    %1882 = vmatprep.subr.mxu0 0.0
    %1883 = vmatpush1.xpose.msra.mxu0 0.0
    %1884 = vmatprep.subr.mxu0 0.0
    %1885 = vmatpush1.xpose.msra.mxu0 0.0
    %1886 = vmatprep.subr.mxu0 0.0
    %1887 = vmatpush1.xpose.msra.mxu0 0.0
    %1888 = vmatprep.subr.mxu0 0.0
    %1889 = vmatpush1.xpose.msra.mxu0 0.0
    %1890 = vmatprep.subr.mxu0 0.0
    %1891 = vmatpush1.xpose.msra.mxu0 0.0
    %1892 = vmatprep.subr.mxu0 0.0
    %1893 = vmatpush1.xpose.msra.mxu0 0.0
    %1894 = vmatprep.subr.mxu0 0.0
    %1895 = vmatpush1.xpose.msra.mxu0 0.0
    %1896 = vmatprep.subr.mxu0 0.0
    %1897 = vmatpush1.xpose.msra.mxu0 0.0
    %1898 = vmatprep.subr.mxu0 0.0
    %1899 = vmatpush1.xpose.msra.mxu0 0.0
    %1900 = vmatprep.mubr.f32.mxu0 0.0
    %1901 = vmatmul.mubr.f32.gmra.mrb[0].mxu0 %v1834
    %v1902 = vpop.f32.mrb[0].mxu0
    %v1903 = vadd.f32 0.0, %v1902
    %v1904 = vpop.f32.mrb[0].mxu0
    %1905 = vdwg.mxu0
    %v1907 = vsel %vm66, %v1830, 0
    %1909 = vmatprep.subr.mxu0 0.0
    %1910 = vmatpush1.xpose.msra.mxu0 %v1907
    %1911 = vmatprep.subr.mxu0 0.0
    %1912 = vmatpush1.xpose.msra.mxu0 0.0
    %1913 = vmatprep.subr.mxu0 0.0
    %1914 = vmatpush1.xpose.msra.mxu0 0.0
    %1915 = vmatprep.subr.mxu0 0.0
    %1916 = vmatpush1.xpose.msra.mxu0 0.0
    %1917 = vmatprep.subr.mxu0 0.0
    %1918 = vmatpush1.xpose.msra.mxu0 0.0
    %1919 = vmatprep.subr.mxu0 0.0
    %1920 = vmatpush1.xpose.msra.mxu0 0.0
    %1921 = vmatprep.subr.mxu0 0.0
    %1922 = vmatpush1.xpose.msra.mxu0 0.0
    %1923 = vmatprep.subr.mxu0 0.0
    %1924 = vmatpush1.xpose.msra.mxu0 0.0
    %1925 = vmatprep.subr.mxu0 0.0
    %1926 = vmatpush1.xpose.msra.mxu0 0.0
    %1927 = vmatprep.subr.mxu0 0.0
    %1928 = vmatpush1.xpose.msra.mxu0 0.0
    %1929 = vmatprep.subr.mxu0 0.0
    %1930 = vmatpush1.xpose.msra.mxu0 0.0
    %1931 = vmatprep.subr.mxu0 0.0
    %1932 = vmatpush1.xpose.msra.mxu0 0.0
    %1933 = vmatprep.subr.mxu0 0.0
    %1934 = vmatpush1.xpose.msra.mxu0 0.0
    %1935 = vmatprep.subr.mxu0 0.0
    %1936 = vmatpush1.xpose.msra.mxu0 0.0
    %1937 = vmatprep.subr.mxu0 0.0
    %1938 = vmatpush1.xpose.msra.mxu0 0.0
    %1939 = vmatprep.subr.mxu0 0.0
    %1940 = vmatpush1.xpose.msra.mxu0 0.0
    %1941 = vmatprep.subr.mxu0 0.0
    %1942 = vmatpush1.xpose.msra.mxu0 0.0
    %1943 = vmatprep.subr.mxu0 0.0
    %1944 = vmatpush1.xpose.msra.mxu0 0.0
    %1945 = vmatprep.subr.mxu0 0.0
    %1946 = vmatpush1.xpose.msra.mxu0 0.0
    %1947 = vmatprep.subr.mxu0 0.0
    %1948 = vmatpush1.xpose.msra.mxu0 0.0
    %1949 = vmatprep.subr.mxu0 0.0
    %1950 = vmatpush1.xpose.msra.mxu0 0.0
    %1951 = vmatprep.subr.mxu0 0.0
    %1952 = vmatpush1.xpose.msra.mxu0 0.0
    %1953 = vmatprep.subr.mxu0 0.0
    %1954 = vmatpush1.xpose.msra.mxu0 0.0
    %1955 = vmatprep.subr.mxu0 0.0
    %1956 = vmatpush1.xpose.msra.mxu0 0.0
    %1957 = vmatprep.subr.mxu0 0.0
    %1958 = vmatpush1.xpose.msra.mxu0 0.0
    %1959 = vmatprep.subr.mxu0 0.0
    %1960 = vmatpush1.xpose.msra.mxu0 0.0
    %1961 = vmatprep.subr.mxu0 0.0
    %1962 = vmatpush1.xpose.msra.mxu0 0.0
    %1963 = vmatprep.subr.mxu0 0.0
    %1964 = vmatpush1.xpose.msra.mxu0 0.0
    %1965 = vmatprep.subr.mxu0 0.0
    %1966 = vmatpush1.xpose.msra.mxu0 0.0
    %1967 = vmatprep.subr.mxu0 0.0
    %1968 = vmatpush1.xpose.msra.mxu0 0.0
    %1969 = vmatprep.subr.mxu0 0.0
    %1970 = vmatpush1.xpose.msra.mxu0 0.0
    %1971 = vmatprep.subr.mxu0 0.0
    %1972 = vmatpush1.xpose.msra.mxu0 0.0
    %1973 = vmatprep.mubr.f32.mxu0 0.0
    %1974 = vmatmul.mubr.f32.gmra.mrb[0].mxu0 %v1907
    %v1975 = vpop.f32.mrb[0].mxu0
    %v1976 = vadd.f32 0.0, %v1975
    %v1977 = vpop.f32.mrb[0].mxu0
    %1978 = vdwg.mxu0
    %1979 = vmatprep.subr.mxu0 0.0
    %1980 = vmatpush1.msra.mxu0 %v61
    %1981 = vmatprep.subr.mxu0 0.0
    %1982 = vmatpush1.msra.mxu0 %v62
    %1983 = vmatprep.subr.mxu0 0.0
    %1984 = vmatpush1.msra.mxu0 %v63
    %1985 = vmatprep.subr.mxu0 0.0
    %1986 = vmatpush1.msra.mxu0 %v64
    %1987 = vmatprep.subr.mxu0 0.0
    %1988 = vmatpush1.msra.mxu0 0.0
    %1989 = vmatprep.subr.mxu0 0.0
    %1990 = vmatpush1.msra.mxu0 0.0
    %1991 = vmatprep.subr.mxu0 0.0
    %1992 = vmatpush1.msra.mxu0 0.0
    %1993 = vmatprep.subr.mxu0 0.0
    %1994 = vmatpush1.msra.mxu0 0.0
    %1995 = vmatprep.subr.mxu0 0.0
    %1996 = vmatpush1.msra.mxu0 0.0
    %1997 = vmatprep.subr.mxu0 0.0
    %1998 = vmatpush1.msra.mxu0 0.0
    %1999 = vmatprep.subr.mxu0 0.0
    %2000 = vmatpush1.msra.mxu0 0.0
    %2001 = vmatprep.subr.mxu0 0.0
    %2002 = vmatpush1.msra.mxu0 0.0
    %2003 = vmatprep.subr.mxu0 0.0
    %2004 = vmatpush1.msra.mxu0 0.0
    %2005 = vmatprep.subr.mxu0 0.0
    %2006 = vmatpush1.msra.mxu0 0.0
    %2007 = vmatprep.subr.mxu0 0.0
    %2008 = vmatpush1.msra.mxu0 0.0
    %2009 = vmatprep.subr.mxu0 0.0
    %2010 = vmatpush1.msra.mxu0 0.0
    %2011 = vmatprep.subr.mxu0 0.0
    %2012 = vmatpush1.msra.mxu0 0.0
    %2013 = vmatprep.subr.mxu0 0.0
    %2014 = vmatpush1.msra.mxu0 0.0
    %2015 = vmatprep.subr.mxu0 0.0
    %2016 = vmatpush1.msra.mxu0 0.0
    %2017 = vmatprep.subr.mxu0 0.0
    %2018 = vmatpush1.msra.mxu0 0.0
    %2019 = vmatprep.subr.mxu0 0.0
    %2020 = vmatpush1.msra.mxu0 0.0
    %2021 = vmatprep.subr.mxu0 0.0
    %2022 = vmatpush1.msra.mxu0 0.0
    %2023 = vmatprep.subr.mxu0 0.0
    %2024 = vmatpush1.msra.mxu0 0.0
    %2025 = vmatprep.subr.mxu0 0.0
    %2026 = vmatpush1.msra.mxu0 0.0
    %2027 = vmatprep.subr.mxu0 0.0
    %2028 = vmatpush1.msra.mxu0 0.0
    %2029 = vmatprep.subr.mxu0 0.0
    %2030 = vmatpush1.msra.mxu0 0.0
    %2031 = vmatprep.subr.mxu0 0.0
    %2032 = vmatpush1.msra.mxu0 0.0
    %2033 = vmatprep.subr.mxu0 0.0
    %2034 = vmatpush1.msra.mxu0 0.0
    %2035 = vmatprep.subr.mxu0 0.0
    %2036 = vmatpush1.msra.mxu0 0.0
    %2037 = vmatprep.subr.mxu0 0.0
    %2038 = vmatpush1.msra.mxu0 0.0
    %2039 = vmatprep.subr.mxu0 0.0
    %2040 = vmatpush1.msra.mxu0 0.0
    %2041 = vmatprep.subr.mxu0 0.0
    %2042 = vmatpush1.msra.mxu0 0.0
    %2043 = vmatprep.mubr.f32.mxu0 0.0
    %2044 = vmatmul.mubr.f32.gmra.mrb[0].mxu0 %v1834
    %v2045 = vpop.f32.mrb[0].mxu0
    %v2046 = vadd.f32 0.0, %v2045
    %v2047 = vpop.f32.mrb[0].mxu0
    %2048 = vmatprep.mubr.f32.mxu0 0.0
    %2049 = vmatmul.mubr.f32.gmra.mrb[0].mxu0 %v1907
    %v2050 = vpop.f32.mrb[0].mxu0
    %v2051 = vadd.f32 0.0, %v2050
    %v2052 = vpop.f32.mrb[0].mxu0
    %2053 = vdwg.mxu0
    %v2055 = vlaneseq
    %v2056 = vshrl.u32 %v2055, 7
    %v2057 = vsub.s32 0, %v2056
    %v2058 = vrot.slane %v65, %v2057
    %v2060 = vadd.f32 %v2046, %v2058
    %v2061 = vadd.f32 %v2051, %v2058
    %v2062 = vmul.f32 %v1903, %v2060
    %v2063 = vmul.f32 %v1976, %v2061
    %v2064 = vsel %vm1000, %v2062, 0.0
    %v2065 = vrot.slane %v2064, 4
    %v2066 = vadd.f32 %v2064, %v2065
    %v2067 = vrot.slane %v2066, 2
    %v2068 = vadd.f32 %v2066, %v2067
    %v2069 = vrot.slane %v2068, 1
    %v2070 = vadd.f32 %v2068, %v2069
    %v2071 = vsel %vm1000, %v2063, 0.0
    %v2072 = vrot.slane %v2071, 4
    %v2073 = vadd.f32 %v2071, %v2072
    %v2074 = vrot.slane %v2073, 2
    %v2075 = vadd.f32 %v2073, %v2074
    %v2076 = vrot.slane %v2075, 1
    %v2077 = vadd.f32 %v2075, %v2076
    %vm2080 = vcmask 1041409
    %v2081 = vsel %vm2080, %v2077, %v2070
    %vm2083 = vcmask 58368
    %2084 = vst.msk [vmem:[#allocation2] sm:$0x3] %vm2083, %v2081
    %2085 = vst [vmem:[#allocation4] sm:$0xff] %v1691
    %2086 = vst [vmem:[#allocation4 + $0x8] sm:$0xff] %v1692
    // Predicated region
    $region22: #{tpu_custom_call.1} parent=1 // pred_check
      _
    $region23: #{tpu_custom_call.1} parent=1 // pred_check_branch
      %2088 = sbr.rel (0) target = $region25
    $region24: #{tpu_custom_call.1} parent=1 // pred_region
      %s2090 = ssub.s32 32, 32
      %2091 = vsyncadd [#allocation3], %s2090
      %s2093 = sshll.u32 [#allocation2], 4
      %s2094 = int_to_ptr.vmem [resolvable:$true] %s2093
      %2096 = dma.vmem_to_hbm [thread:$0]  %s2094, 32, %s5, [#allocation3]
    $region25: #{tpu_custom_call.1} parent=1 // pred_fallthru
      _
    // Predicated region
    $region26: #{tpu_custom_call.1} parent=1 // pred_check
      _
    $region27: #{tpu_custom_call.1} parent=1 // pred_check_branch
      %2098 = sbr.rel (0) target = $region29
    $region28: #{tpu_custom_call.1} parent=1 // pred_region
      %s2100 = ssub.s32 256, 256
      %2101 = vsyncadd [#allocation5], %s2100
      %s2102 = sshll.u32 [#allocation4], 4
      %s2103 = int_to_ptr.vmem [resolvable:$true] %s2102
      %2108 = dma.vmem_to_hbm [thread:$0]  %s2103, 256, %s6, [#allocation5], 128, 128, 8
    $region29: #{tpu_custom_call.1} parent=1 // pred_fallthru
      _
    // Predicated region
    $region30: #{tpu_custom_call.1} parent=1 // pred_check
      _
    $region31: #{tpu_custom_call.1} parent=1 // pred_check_branch
      %2110 = sbr.rel (0) target = $region33
    $region32: #{tpu_custom_call.1} parent=1 // pred_region
      %2111 = dma.done [#allocation3], 32
    $region33: #{tpu_custom_call.1} parent=1 // pred_fallthru
      _
    // Predicated region
    $region34: #{tpu_custom_call.1} parent=1 // pred_check
      _
    $region35: #{tpu_custom_call.1} parent=1 // pred_check_branch
      %2113 = sbr.rel (0) target = $region37
    $region36: #{tpu_custom_call.1} parent=1 // pred_region
      %2114 = dma.done [#allocation5], 256
    $region37: #{tpu_custom_call.1} parent=1 // pred_fallthru
      _
    %2115 = vsyncpa [#allocation3], 1
    %2116 = vsyncpa [#allocation5], 1

</llo_original>
